<compile_context>
chip_gen: v7x
topology: tpu7x:2x2x1
jax: 0.10.0
libtpu: 0.0.40
codegen_flags: <defaults>
</compile_context>

<pallas_src>
import functools

import jax
import jax.numpy as jnp
from jax import lax
from jax.experimental import pallas as pl
from jax.experimental.pallas import tpu as pltpu


def _upconcat_kernel(xr_ref, w_ref, b_ref, dn_ref, out_ref, *, cd, cout, tb, w2):
    # xr_ref : (1, Cin, tb*2W)      lane-doubled input pixels (contiguous NCHW slice)
    # w_ref  : (4*Cout, Cin)        rows ordered (kw, kh, co)
    # b_ref  : (2*Cout, 1)          rows ordered (kh, co)
    # dn_ref : (1, Cd, tb, 4W)      skip connection (free reshape of (Cd, 2H, 2W))
    # out_ref: (1, Cd+Cout, tb, 4W) final concat output block

    # ---- fused channel concat: copy the skip-connection half ------------------
    out_ref[0, 0:cd, :, :] = dn_ref[0, :, :, :].astype(out_ref.dtype)

    # ---- deconv half: one lane-dense matmul per grid step ---------------------
    y4 = jnp.dot(w_ref[...], xr_ref[0, :, :],
                 preferred_element_type=jnp.float32)            # (4*Cout, tb*2W)

    # lane parity selects kw=0 vs kw=1 weight block (input lanes were doubled)
    lane = lax.broadcasted_iota(jnp.int32, (2 * cout, y4.shape[1]), 1)
    y = jnp.where(lane % 2 == 0, y4[0:2 * cout, :], y4[2 * cout:, :])
    y = (y + b_ref[...]).astype(out_ref.dtype)                   # (2*Cout, tb*2W)

    # ---- row scatter: kh=0 -> even output rows (lanes [0, 2W)),
    #                   kh=1 -> odd  output rows (lanes [2W, 4W)) ---------------
    for hh in range(tb):                       # static unroll, tb is small
        seg = y[:, hh * w2:(hh + 1) * w2]      # (2*Cout, 2W)
        out_ref[0, cd:cd + cout, hh, 0:w2] = seg[0:cout, :]
        out_ref[0, cd:cd + cout, hh, w2:2 * w2] = seg[cout:, :]


def up_concat(inputs, down_outputs, weight, bias, *, tb=None):
    """Fused forward of UpConcat: cat([down_outputs, ConvT2d_{k=2,s=2}(inputs)], 1)."""
    N, cin, H, W = inputs.shape
    cout = weight.shape[1]
    Nd, cd, H2, W2d = down_outputs.shape
    assert Nd == N and H2 == 2 * H and W2d == 2 * W
    assert weight.shape == (cin, cout, 2, 2) and bias.shape == (cout,)

    w2 = 2 * W
    if tb is None:
        tb = H                                    # biggest row band that exists
    assert H % tb == 0 and (tb == H or tb % 8 == 0)
    assert tb == H or (tb * w2) % 128 == 0

    # ---- cheap wrapper-side prep (only touches the SMALL operands) ------------
    # lane-doubled pixels: xr[n, ci, h, 2w + kw'] = x[n, ci, h, w]
    xr = jnp.repeat(inputs, 2, axis=-1).reshape(N, cin, H * w2)
    # weight rows ordered (kw, kh, co)
    w_rows = jnp.transpose(weight, (3, 2, 1, 0)).reshape(4 * cout, cin)
    # bias rows ordered (kh, co)
    b_rows = jnp.tile(bias, 2).reshape(2 * cout, 1).astype(jnp.float32)
    # skip connection viewed as (N, Cd, H, 4W)  -- contiguous, free
    dn = down_outputs.reshape(N, cd, H, 2 * w2)

    ct = cd + cout
    grid = (N, H // tb)

    itemsize = jnp.dtype(inputs.dtype).itemsize
    flops = 2 * N * (4 * cout) * cin * (H * w2)
    bytes_accessed = itemsize * (xr.size + w_rows.size + b_rows.size + dn.size
                                 + N * ct * H * 2 * w2)

    kern = functools.partial(_upconcat_kernel, cd=cd, cout=cout, tb=tb, w2=w2)

    out = pl.pallas_call(
        kern,
        out_shape=jax.ShapeDtypeStruct((N, ct, H, 2 * w2), inputs.dtype),
        grid_spec=pltpu.PrefetchScalarGridSpec(
            num_scalar_prefetch=0,
            grid=grid,
            in_specs=[
                pl.BlockSpec((1, cin, tb * w2), lambda n, hb: (n, 0, hb)),
                pl.BlockSpec((4 * cout, cin), lambda n, hb: (0, 0)),
                pl.BlockSpec((2 * cout, 1), lambda n, hb: (0, 0)),
                pl.BlockSpec((1, cd, tb, 2 * w2), lambda n, hb: (n, 0, hb, 0)),
            ],
            out_specs=pl.BlockSpec((1, ct, tb, 2 * w2), lambda n, hb: (n, 0, hb, 0)),
        ),
        compiler_params=pltpu.CompilerParams(
            dimension_semantics=("parallel", "parallel")),
        cost_estimate=pl.CostEstimate(
            flops=flops, transcendentals=0, bytes_accessed=bytes_accessed),
    )(xr, w_rows, b_rows, dn)

    # free, contiguous reshape: (N, Ct, H, 4W) -> (N, Ct, 2H, 2W)
    return out.reshape(N, ct, 2 * H, 2 * W)


def _reference(inputs, down_outputs, weight, bias):
    # Pure-JAX reference for the same semantics.
    N, cin, H, W = inputs.shape
    cout = weight.shape[1]
    out = jnp.einsum("nihw,iokl->nohkwl", inputs, weight)   # (N, Cout, H, 2, W, 2)
    out = out.reshape(N, cout, 2 * H, 2 * W) + bias[None, :, None, None]
    return jnp.concatenate([down_outputs, out], axis=1)


if __name__ == "__main__":
    key = jax.random.PRNGKey(0)
    k1, k2, k3, k4 = jax.random.split(key, 4)

    # Small shapes: batch=2, in_feat=4, out_feat=8, spatial=16
    N, in_feat, out_feat, H, W = 2, 4, 8, 16, 16

    inputs = jax.random.normal(k1, (N, in_feat, H, W), dtype=jnp.float32)
    down_outputs = jax.random.normal(
        k2, (N, out_feat, 2 * H, 2 * W), dtype=jnp.float32)
    weight = 0.1 * jax.random.normal(
        k3, (in_feat, out_feat, 2, 2), dtype=jnp.float32)   # ConvTranspose2d layout
    bias = 0.1 * jax.random.normal(k4, (out_feat,), dtype=jnp.float32)

    out = up_concat(inputs, down_outputs, weight, bias)
    out = jax.block_until_ready(out)

    ref = _reference(inputs, down_outputs, weight, bias)
    assert out.shape == (N, 2 * out_feat, 2 * H, 2 * W), out.shape
    assert jnp.allclose(out, ref, atol=1e-5, rtol=1e-5)

    print("KERNEL_OK")
</pallas_src>

<mosaic_0001>
module attributes {stable_mosaic.version = 11 : i64} {
  func.func @_upconcat_kernel(%arg0: i32, %arg1: i32, %arg2: memref<1x4x512xf32, #tpu.memory_space<vmem>>, %arg3: memref<32x4xf32, #tpu.memory_space<vmem>>, %arg4: memref<16x1xf32, #tpu.memory_space<vmem>>, %arg5: memref<1x8x16x64xf32, #tpu.memory_space<vmem>>, %arg6: memref<1x16x16x64xf32, #tpu.memory_space<vmem>>) attributes {dimension_semantics = [#tpu.dimension_semantics<parallel>, #tpu.dimension_semantics<parallel>], iteration_bounds = array<i64: 2, 1>, scalar_prefetch = 0 : i64, scratch_operands = 0 : i64, tpu.core_type = #tpu.core_type<tc>, window_params = [{transform_indices = @transform_0, window_bounds = array<i64: 1, 4, 512>}, {pipeline_mode = #tpu.pipeline_mode<synchronous>, transform_indices = @transform_1, window_bounds = array<i64: 32, 4>}, {pipeline_mode = #tpu.pipeline_mode<synchronous>, transform_indices = @transform_2, window_bounds = array<i64: 16, 1>}, {transform_indices = @transform_3, window_bounds = array<i64: 1, 8, 16, 64>}, {transform_indices = @transform_4, window_bounds = array<i64: 1, 16, 16, 64>}]} {
    %c0 = arith.constant 0 : index
    %c0_0 = arith.constant 0 : index
    %c0_1 = arith.constant 0 : index
    %c0_2 = arith.constant 0 : index
    %0 = vector.load %arg5[%c0, %c0_0, %c0_1, %c0_2] : memref<1x8x16x64xf32, #tpu.memory_space<vmem>>, vector<1x8x16x64xf32>
    %1 = vector.shape_cast %0 : vector<1x8x16x64xf32> to vector<8x16x64xf32>
    %c0_3 = arith.constant 0 : index
    %c0_4 = arith.constant 0 : index
    %c0_5 = arith.constant 0 : index
    %c0_6 = arith.constant 0 : index
    %2 = vector.load %arg6[%c0_3, %c0_4, %c0_5, %c0_6] : memref<1x16x16x64xf32, #tpu.memory_space<vmem>>, vector<1x8x16x64xf32>
    %3 = vector.shape_cast %2 : vector<1x8x16x64xf32> to vector<8x16x64xf32>
    %4 = vector.shape_cast %1 : vector<8x16x64xf32> to vector<1x8x16x64xf32>
    tpu.vector_store %arg6[%c0_3, %c0_4, %c0_5, %c0_6], %4 {strides = array<i32>} : memref<1x16x16x64xf32, #tpu.memory_space<vmem>>, vector<1x8x16x64xf32>,
    %c0_7 = arith.constant 0 : index
    %c0_8 = arith.constant 0 : index
    %5 = vector.load %arg3[%c0_7, %c0_8] : memref<32x4xf32, #tpu.memory_space<vmem>>, vector<32x4xf32>
    %c0_9 = arith.constant 0 : index
    %c0_10 = arith.constant 0 : index
    %c0_11 = arith.constant 0 : index
    %6 = vector.load %arg2[%c0_9, %c0_10, %c0_11] : memref<1x4x512xf32, #tpu.memory_space<vmem>>, vector<1x4x512xf32>
    %7 = vector.shape_cast %6 : vector<1x4x512xf32> to vector<4x512xf32>
    %cst = arith.constant dense<0.000000e+00> : vector<32x512xf32>
    %8 = tpu.matmul %5, %7, %cst {dimension_numbers = #tpu.dot_dimension_numbers<[1], [0], [0], [1], [0, 0, 1, 1], [], []>} : vector<32x4xf32>, vector<4x512xf32>, vector<32x512xf32> -> vector<32x512xf32>
    %9 = tpu.iota {dimensions = array<i32: 1>} : vector<16x512xi32>
    %c2_i32 = arith.constant 2 : i32
    %c0_i32 = arith.constant 0 : i32
    %10 = arith.cmpi eq, %c2_i32, %c0_i32 : i32
    %c1_i32 = arith.constant 1 : i32
    %11 = arith.select %10, %c1_i32, %c2_i32 : i32
    %12 = vector.broadcast %11 : i32 to vector<16x512xi32>
    %13 = arith.remsi %9, %12 : vector<16x512xi32>
    %c0_i32_12 = arith.constant 0 : i32
    %14 = vector.broadcast %c0_i32_12 : i32 to vector<16x512xi32>
    %15 = arith.cmpi ne, %13, %14 : vector<16x512xi32>
    %c0_i32_13 = arith.constant 0 : i32
    %16 = vector.broadcast %c0_i32_13 : i32 to vector<16x512xi32>
    %17 = arith.cmpi slt, %13, %16 : vector<16x512xi32>
    %c0_i32_14 = arith.constant 0 : i32
    %18 = arith.cmpi slt, %11, %c0_i32_14 : i32
    %19 = vector.broadcast %18 : i1 to vector<16x512xi1>
    %20 = vector.broadcast %19 : vector<16x512xi1> to vector<16x512xi1>
    %21 = arith.xori %17, %20 : vector<16x512xi1>
    %22 = arith.andi %21, %15 : vector<16x512xi1>
    %23 = vector.broadcast %11 : i32 to vector<16x512xi32>
    %24 = arith.addi %13, %23 : vector<16x512xi32>
    %25 = arith.select %22, %24, %13 : vector<16x512xi1>, vector<16x512xi32>
    %c0_i32_15 = arith.constant 0 : i32
    %26 = vector.broadcast %c0_i32_15 : i32 to vector<16x512xi32>
    %27 = arith.cmpi eq, %25, %26 : vector<16x512xi32>
    %28 = vector.extract_strided_slice %8 {offsets = [0, 0], sizes = [16, 512], strides = [1, 1]} : vector<32x512xf32> to vector<16x512xf32>
    %29 = vector.extract_strided_slice %8 {offsets = [16, 0], sizes = [16, 512], strides = [1, 1]} : vector<32x512xf32> to vector<16x512xf32>
    %30 = arith.select %27, %28, %29 : vector<16x512xi1>, vector<16x512xf32>
    %c0_16 = arith.constant 0 : index
    %c0_17 = arith.constant 0 : index
    %31 = vector.load %arg4[%c0_16, %c0_17] : memref<16x1xf32, #tpu.memory_space<vmem>>, vector<16x1xf32>
    %32 = vector.broadcast %31 : vector<16x1xf32> to vector<16x512xf32>
    %33 = arith.addf %30, %32 : vector<16x512xf32>
    %34 = vector.extract_strided_slice %33 {offsets = [0, 0], sizes = [16, 32], strides = [1, 1]} : vector<16x512xf32> to vector<16x32xf32>
    %35 = vector.extract_strided_slice %34 {offsets = [0, 0], sizes = [8, 32], strides = [1, 1]} : vector<16x32xf32> to vector<8x32xf32>
    %c0_18 = arith.constant 0 : index
    %c8 = arith.constant 8 : index
    %c0_19 = arith.constant 0 : index
    %c0_20 = arith.constant 0 : index
    %36 = vector.load %arg6[%c0_18, %c8, %c0_19, %c0_20] : memref<1x16x16x64xf32, #tpu.memory_space<vmem>>, vector<1x8x1x32xf32>
    %37 = vector.shape_cast %36 : vector<1x8x1x32xf32> to vector<8x32xf32>
    %38 = vector.shape_cast %35 : vector<8x32xf32> to vector<1x8x1x32xf32>
    tpu.vector_store %arg6[%c0_18, %c8, %c0_19, %c0_20], %38 {strides = array<i32>} : memref<1x16x16x64xf32, #tpu.memory_space<vmem>>, vector<1x8x1x32xf32>,
    %39 = vector.extract_strided_slice %34 {offsets = [8, 0], sizes = [8, 32], strides = [1, 1]} : vector<16x32xf32> to vector<8x32xf32>
    %c0_21 = arith.constant 0 : index
    %c8_22 = arith.constant 8 : index
    %c0_23 = arith.constant 0 : index
    %c32 = arith.constant 32 : index
    %40 = vector.load %arg6[%c0_21, %c8_22, %c0_23, %c32] : memref<1x16x16x64xf32, #tpu.memory_space<vmem>>, vector<1x8x1x32xf32>
    %41 = vector.shape_cast %40 : vector<1x8x1x32xf32> to vector<8x32xf32>
    %42 = vector.shape_cast %39 : vector<8x32xf32> to vector<1x8x1x32xf32>
    tpu.vector_store %arg6[%c0_21, %c8_22, %c0_23, %c32], %42 {strides = array<i32>} : memref<1x16x16x64xf32, #tpu.memory_space<vmem>>, vector<1x8x1x32xf32>,
    %43 = vector.extract_strided_slice %33 {offsets = [0, 32], sizes = [16, 32], strides = [1, 1]} : vector<16x512xf32> to vector<16x32xf32>
    %44 = vector.extract_strided_slice %43 {offsets = [0, 0], sizes = [8, 32], strides = [1, 1]} : vector<16x32xf32> to vector<8x32xf32>
    %c0_24 = arith.constant 0 : index
    %c8_25 = arith.constant 8 : index
    %c1 = arith.constant 1 : index
    %c0_26 = arith.constant 0 : index
    %45 = vector.load %arg6[%c0_24, %c8_25, %c1, %c0_26] : memref<1x16x16x64xf32, #tpu.memory_space<vmem>>, vector<1x8x1x32xf32>
    %46 = vector.shape_cast %45 : vector<1x8x1x32xf32> to vector<8x32xf32>
    %47 = vector.shape_cast %44 : vector<8x32xf32> to vector<1x8x1x32xf32>
    tpu.vector_store %arg6[%c0_24, %c8_25, %c1, %c0_26], %47 {strides = array<i32>} : memref<1x16x16x64xf32, #tpu.memory_space<vmem>>, vector<1x8x1x32xf32>,
    %48 = vector.extract_strided_slice %43 {offsets = [8, 0], sizes = [8, 32], strides = [1, 1]} : vector<16x32xf32> to vector<8x32xf32>
    %c0_27 = arith.constant 0 : index
    %c8_28 = arith.constant 8 : index
    %c1_29 = arith.constant 1 : index
    %c32_30 = arith.constant 32 : index
    %49 = vector.load %arg6[%c0_27, %c8_28, %c1_29, %c32_30] : memref<1x16x16x64xf32, #tpu.memory_space<vmem>>, vector<1x8x1x32xf32>
    %50 = vector.shape_cast %49 : vector<1x8x1x32xf32> to vector<8x32xf32>
    %51 = vector.shape_cast %48 : vector<8x32xf32> to vector<1x8x1x32xf32>
    tpu.vector_store %arg6[%c0_27, %c8_28, %c1_29, %c32_30], %51 {strides = array<i32>} : memref<1x16x16x64xf32, #tpu.memory_space<vmem>>, vector<1x8x1x32xf32>,
    %52 = vector.extract_strided_slice %33 {offsets = [0, 64], sizes = [16, 32], strides = [1, 1]} : vector<16x512xf32> to vector<16x32xf32>
    %53 = vector.extract_strided_slice %52 {offsets = [0, 0], sizes = [8, 32], strides = [1, 1]} : vector<16x32xf32> to vector<8x32xf32>
    %c0_31 = arith.constant 0 : index
    %c8_32 = arith.constant 8 : index
    %c2 = arith.constant 2 : index
    %c0_33 = arith.constant 0 : index
    %54 = vector.load %arg6[%c0_31, %c8_32, %c2, %c0_33] : memref<1x16x16x64xf32, #tpu.memory_space<vmem>>, vector<1x8x1x32xf32>
    %55 = vector.shape_cast %54 : vector<1x8x1x32xf32> to vector<8x32xf32>
    %56 = vector.shape_cast %53 : vector<8x32xf32> to vector<1x8x1x32xf32>
    tpu.vector_store %arg6[%c0_31, %c8_32, %c2, %c0_33], %56 {strides = array<i32>} : memref<1x16x16x64xf32, #tpu.memory_space<vmem>>, vector<1x8x1x32xf32>,
    %57 = vector.extract_strided_slice %52 {offsets = [8, 0], sizes = [8, 32], strides = [1, 1]} : vector<16x32xf32> to vector<8x32xf32>
    %c0_34 = arith.constant 0 : index
    %c8_35 = arith.constant 8 : index
    %c2_36 = arith.constant 2 : index
    %c32_37 = arith.constant 32 : index
    %58 = vector.load %arg6[%c0_34, %c8_35, %c2_36, %c32_37] : memref<1x16x16x64xf32, #tpu.memory_space<vmem>>, vector<1x8x1x32xf32>
    %59 = vector.shape_cast %58 : vector<1x8x1x32xf32> to vector<8x32xf32>
    %60 = vector.shape_cast %57 : vector<8x32xf32> to vector<1x8x1x32xf32>
    tpu.vector_store %arg6[%c0_34, %c8_35, %c2_36, %c32_37], %60 {strides = array<i32>} : memref<1x16x16x64xf32, #tpu.memory_space<vmem>>, vector<1x8x1x32xf32>,
    %61 = vector.extract_strided_slice %33 {offsets = [0, 96], sizes = [16, 32], strides = [1, 1]} : vector<16x512xf32> to vector<16x32xf32>
    %62 = vector.extract_strided_slice %61 {offsets = [0, 0], sizes = [8, 32], strides = [1, 1]} : vector<16x32xf32> to vector<8x32xf32>
    %c0_38 = arith.constant 0 : index
    %c8_39 = arith.constant 8 : index
    %c3 = arith.constant 3 : index
    %c0_40 = arith.constant 0 : index
    %63 = vector.load %arg6[%c0_38, %c8_39, %c3, %c0_40] : memref<1x16x16x64xf32, #tpu.memory_space<vmem>>, vector<1x8x1x32xf32>
    %64 = vector.shape_cast %63 : vector<1x8x1x32xf32> to vector<8x32xf32>
    %65 = vector.shape_cast %62 : vector<8x32xf32> to vector<1x8x1x32xf32>
    tpu.vector_store %arg6[%c0_38, %c8_39, %c3, %c0_40], %65 {strides = array<i32>} : memref<1x16x16x64xf32, #tpu.memory_space<vmem>>, vector<1x8x1x32xf32>,
    %66 = vector.extract_strided_slice %61 {offsets = [8, 0], sizes = [8, 32], strides = [1, 1]} : vector<16x32xf32> to vector<8x32xf32>
    %c0_41 = arith.constant 0 : index
    %c8_42 = arith.constant 8 : index
    %c3_43 = arith.constant 3 : index
    %c32_44 = arith.constant 32 : index
    %67 = vector.load %arg6[%c0_41, %c8_42, %c3_43, %c32_44] : memref<1x16x16x64xf32, #tpu.memory_space<vmem>>, vector<1x8x1x32xf32>
    %68 = vector.shape_cast %67 : vector<1x8x1x32xf32> to vector<8x32xf32>
    %69 = vector.shape_cast %66 : vector<8x32xf32> to vector<1x8x1x32xf32>
    tpu.vector_store %arg6[%c0_41, %c8_42, %c3_43, %c32_44], %69 {strides = array<i32>} : memref<1x16x16x64xf32, #tpu.memory_space<vmem>>, vector<1x8x1x32xf32>,
    %70 = vector.extract_strided_slice %33 {offsets = [0, 128], sizes = [16, 32], strides = [1, 1]} : vector<16x512xf32> to vector<16x32xf32>
    %71 = vector.extract_strided_slice %70 {offsets = [0, 0], sizes = [8, 32], strides = [1, 1]} : vector<16x32xf32> to vector<8x32xf32>
    %c0_45 = arith.constant 0 : index
    %c8_46 = arith.constant 8 : index
    %c4 = arith.constant 4 : index
    %c0_47 = arith.constant 0 : index
    %72 = vector.load %arg6[%c0_45, %c8_46, %c4, %c0_47] : memref<1x16x16x64xf32, #tpu.memory_space<vmem>>, vector<1x8x1x32xf32>
    %73 = vector.shape_cast %72 : vector<1x8x1x32xf32> to vector<8x32xf32>
    %74 = vector.shape_cast %71 : vector<8x32xf32> to vector<1x8x1x32xf32>
    tpu.vector_store %arg6[%c0_45, %c8_46, %c4, %c0_47], %74 {strides = array<i32>} : memref<1x16x16x64xf32, #tpu.memory_space<vmem>>, vector<1x8x1x32xf32>,
    %75 = vector.extract_strided_slice %70 {offsets = [8, 0], sizes = [8, 32], strides = [1, 1]} : vector<16x32xf32> to vector<8x32xf32>
    %c0_48 = arith.constant 0 : index
    %c8_49 = arith.constant 8 : index
    %c4_50 = arith.constant 4 : index
    %c32_51 = arith.constant 32 : index
    %76 = vector.load %arg6[%c0_48, %c8_49, %c4_50, %c32_51] : memref<1x16x16x64xf32, #tpu.memory_space<vmem>>, vector<1x8x1x32xf32>
    %77 = vector.shape_cast %76 : vector<1x8x1x32xf32> to vector<8x32xf32>
    %78 = vector.shape_cast %75 : vector<8x32xf32> to vector<1x8x1x32xf32>
    tpu.vector_store %arg6[%c0_48, %c8_49, %c4_50, %c32_51], %78 {strides = array<i32>} : memref<1x16x16x64xf32, #tpu.memory_space<vmem>>, vector<1x8x1x32xf32>,
    %79 = vector.extract_strided_slice %33 {offsets = [0, 160], sizes = [16, 32], strides = [1, 1]} : vector<16x512xf32> to vector<16x32xf32>
    %80 = vector.extract_strided_slice %79 {offsets = [0, 0], sizes = [8, 32], strides = [1, 1]} : vector<16x32xf32> to vector<8x32xf32>
    %c0_52 = arith.constant 0 : index
    %c8_53 = arith.constant 8 : index
    %c5 = arith.constant 5 : index
    %c0_54 = arith.constant 0 : index
    %81 = vector.load %arg6[%c0_52, %c8_53, %c5, %c0_54] : memref<1x16x16x64xf32, #tpu.memory_space<vmem>>, vector<1x8x1x32xf32>
    %82 = vector.shape_cast %81 : vector<1x8x1x32xf32> to vector<8x32xf32>
    %83 = vector.shape_cast %80 : vector<8x32xf32> to vector<1x8x1x32xf32>
    tpu.vector_store %arg6[%c0_52, %c8_53, %c5, %c0_54], %83 {strides = array<i32>} : memref<1x16x16x64xf32, #tpu.memory_space<vmem>>, vector<1x8x1x32xf32>,
    %84 = vector.extract_strided_slice %79 {offsets = [8, 0], sizes = [8, 32], strides = [1, 1]} : vector<16x32xf32> to vector<8x32xf32>
    %c0_55 = arith.constant 0 : index
    %c8_56 = arith.constant 8 : index
    %c5_57 = arith.constant 5 : index
    %c32_58 = arith.constant 32 : index
    %85 = vector.load %arg6[%c0_55, %c8_56, %c5_57, %c32_58] : memref<1x16x16x64xf32, #tpu.memory_space<vmem>>, vector<1x8x1x32xf32>
    %86 = vector.shape_cast %85 : vector<1x8x1x32xf32> to vector<8x32xf32>
    %87 = vector.shape_cast %84 : vector<8x32xf32> to vector<1x8x1x32xf32>
    tpu.vector_store %arg6[%c0_55, %c8_56, %c5_57, %c32_58], %87 {strides = array<i32>} : memref<1x16x16x64xf32, #tpu.memory_space<vmem>>, vector<1x8x1x32xf32>,
    %88 = vector.extract_strided_slice %33 {offsets = [0, 192], sizes = [16, 32], strides = [1, 1]} : vector<16x512xf32> to vector<16x32xf32>
    %89 = vector.extract_strided_slice %88 {offsets = [0, 0], sizes = [8, 32], strides = [1, 1]} : vector<16x32xf32> to vector<8x32xf32>
    %c0_59 = arith.constant 0 : index
    %c8_60 = arith.constant 8 : index
    %c6 = arith.constant 6 : index
    %c0_61 = arith.constant 0 : index
    %90 = vector.load %arg6[%c0_59, %c8_60, %c6, %c0_61] : memref<1x16x16x64xf32, #tpu.memory_space<vmem>>, vector<1x8x1x32xf32>
    %91 = vector.shape_cast %90 : vector<1x8x1x32xf32> to vector<8x32xf32>
    %92 = vector.shape_cast %89 : vector<8x32xf32> to vector<1x8x1x32xf32>
    tpu.vector_store %arg6[%c0_59, %c8_60, %c6, %c0_61], %92 {strides = array<i32>} : memref<1x16x16x64xf32, #tpu.memory_space<vmem>>, vector<1x8x1x32xf32>,
    %93 = vector.extract_strided_slice %88 {offsets = [8, 0], sizes = [8, 32], strides = [1, 1]} : vector<16x32xf32> to vector<8x32xf32>
    %c0_62 = arith.constant 0 : index
    %c8_63 = arith.constant 8 : index
    %c6_64 = arith.constant 6 : index
    %c32_65 = arith.constant 32 : index
    %94 = vector.load %arg6[%c0_62, %c8_63, %c6_64, %c32_65] : memref<1x16x16x64xf32, #tpu.memory_space<vmem>>, vector<1x8x1x32xf32>
    %95 = vector.shape_cast %94 : vector<1x8x1x32xf32> to vector<8x32xf32>
    %96 = vector.shape_cast %93 : vector<8x32xf32> to vector<1x8x1x32xf32>
    tpu.vector_store %arg6[%c0_62, %c8_63, %c6_64, %c32_65], %96 {strides = array<i32>} : memref<1x16x16x64xf32, #tpu.memory_space<vmem>>, vector<1x8x1x32xf32>,
    %97 = vector.extract_strided_slice %33 {offsets = [0, 224], sizes = [16, 32], strides = [1, 1]} : vector<16x512xf32> to vector<16x32xf32>
    %98 = vector.extract_strided_slice %97 {offsets = [0, 0], sizes = [8, 32], strides = [1, 1]} : vector<16x32xf32> to vector<8x32xf32>
    %c0_66 = arith.constant 0 : index
    %c8_67 = arith.constant 8 : index
    %c7 = arith.constant 7 : index
    %c0_68 = arith.constant 0 : index
    %99 = vector.load %arg6[%c0_66, %c8_67, %c7, %c0_68] : memref<1x16x16x64xf32, #tpu.memory_space<vmem>>, vector<1x8x1x32xf32>
    %100 = vector.shape_cast %99 : vector<1x8x1x32xf32> to vector<8x32xf32>
    %101 = vector.shape_cast %98 : vector<8x32xf32> to vector<1x8x1x32xf32>
    tpu.vector_store %arg6[%c0_66, %c8_67, %c7, %c0_68], %101 {strides = array<i32>} : memref<1x16x16x64xf32, #tpu.memory_space<vmem>>, vector<1x8x1x32xf32>,
    %102 = vector.extract_strided_slice %97 {offsets = [8, 0], sizes = [8, 32], strides = [1, 1]} : vector<16x32xf32> to vector<8x32xf32>
    %c0_69 = arith.constant 0 : index
    %c8_70 = arith.constant 8 : index
    %c7_71 = arith.constant 7 : index
    %c32_72 = arith.constant 32 : index
    %103 = vector.load %arg6[%c0_69, %c8_70, %c7_71, %c32_72] : memref<1x16x16x64xf32, #tpu.memory_space<vmem>>, vector<1x8x1x32xf32>
    %104 = vector.shape_cast %103 : vector<1x8x1x32xf32> to vector<8x32xf32>
    %105 = vector.shape_cast %102 : vector<8x32xf32> to vector<1x8x1x32xf32>
    tpu.vector_store %arg6[%c0_69, %c8_70, %c7_71, %c32_72], %105 {strides = array<i32>} : memref<1x16x16x64xf32, #tpu.memory_space<vmem>>, vector<1x8x1x32xf32>,
    %106 = vector.extract_strided_slice %33 {offsets = [0, 256], sizes = [16, 32], strides = [1, 1]} : vector<16x512xf32> to vector<16x32xf32>
    %107 = vector.extract_strided_slice %106 {offsets = [0, 0], sizes = [8, 32], strides = [1, 1]} : vector<16x32xf32> to vector<8x32xf32>
    %c0_73 = arith.constant 0 : index
    %c8_74 = arith.constant 8 : index
    %c8_75 = arith.constant 8 : index
    %c0_76 = arith.constant 0 : index
    %108 = vector.load %arg6[%c0_73, %c8_74, %c8_75, %c0_76] : memref<1x16x16x64xf32, #tpu.memory_space<vmem>>, vector<1x8x1x32xf32>
    %109 = vector.shape_cast %108 : vector<1x8x1x32xf32> to vector<8x32xf32>
    %110 = vector.shape_cast %107 : vector<8x32xf32> to vector<1x8x1x32xf32>
    tpu.vector_store %arg6[%c0_73, %c8_74, %c8_75, %c0_76], %110 {strides = array<i32>} : memref<1x16x16x64xf32, #tpu.memory_space<vmem>>, vector<1x8x1x32xf32>,
    %111 = vector.extract_strided_slice %106 {offsets = [8, 0], sizes = [8, 32], strides = [1, 1]} : vector<16x32xf32> to vector<8x32xf32>
    %c0_77 = arith.constant 0 : index
    %c8_78 = arith.constant 8 : index
    %c8_79 = arith.constant 8 : index
    %c32_80 = arith.constant 32 : index
    %112 = vector.load %arg6[%c0_77, %c8_78, %c8_79, %c32_80] : memref<1x16x16x64xf32, #tpu.memory_space<vmem>>, vector<1x8x1x32xf32>
    %113 = vector.shape_cast %112 : vector<1x8x1x32xf32> to vector<8x32xf32>
    %114 = vector.shape_cast %111 : vector<8x32xf32> to vector<1x8x1x32xf32>
    tpu.vector_store %arg6[%c0_77, %c8_78, %c8_79, %c32_80], %114 {strides = array<i32>} : memref<1x16x16x64xf32, #tpu.memory_space<vmem>>, vector<1x8x1x32xf32>,
    %115 = vector.extract_strided_slice %33 {offsets = [0, 288], sizes = [16, 32], strides = [1, 1]} : vector<16x512xf32> to vector<16x32xf32>
    %116 = vector.extract_strided_slice %115 {offsets = [0, 0], sizes = [8, 32], strides = [1, 1]} : vector<16x32xf32> to vector<8x32xf32>
    %c0_81 = arith.constant 0 : index
    %c8_82 = arith.constant 8 : index
    %c9 = arith.constant 9 : index
    %c0_83 = arith.constant 0 : index
    %117 = vector.load %arg6[%c0_81, %c8_82, %c9, %c0_83] : memref<1x16x16x64xf32, #tpu.memory_space<vmem>>, vector<1x8x1x32xf32>
    %118 = vector.shape_cast %117 : vector<1x8x1x32xf32> to vector<8x32xf32>
    %119 = vector.shape_cast %116 : vector<8x32xf32> to vector<1x8x1x32xf32>
    tpu.vector_store %arg6[%c0_81, %c8_82, %c9, %c0_83], %119 {strides = array<i32>} : memref<1x16x16x64xf32, #tpu.memory_space<vmem>>, vector<1x8x1x32xf32>,
    %120 = vector.extract_strided_slice %115 {offsets = [8, 0], sizes = [8, 32], strides = [1, 1]} : vector<16x32xf32> to vector<8x32xf32>
    %c0_84 = arith.constant 0 : index
    %c8_85 = arith.constant 8 : index
    %c9_86 = arith.constant 9 : index
    %c32_87 = arith.constant 32 : index
    %121 = vector.load %arg6[%c0_84, %c8_85, %c9_86, %c32_87] : memref<1x16x16x64xf32, #tpu.memory_space<vmem>>, vector<1x8x1x32xf32>
    %122 = vector.shape_cast %121 : vector<1x8x1x32xf32> to vector<8x32xf32>
    %123 = vector.shape_cast %120 : vector<8x32xf32> to vector<1x8x1x32xf32>
    tpu.vector_store %arg6[%c0_84, %c8_85, %c9_86, %c32_87], %123 {strides = array<i32>} : memref<1x16x16x64xf32, #tpu.memory_space<vmem>>, vector<1x8x1x32xf32>,
    %124 = vector.extract_strided_slice %33 {offsets = [0, 320], sizes = [16, 32], strides = [1, 1]} : vector<16x512xf32> to vector<16x32xf32>
    %125 = vector.extract_strided_slice %124 {offsets = [0, 0], sizes = [8, 32], strides = [1, 1]} : vector<16x32xf32> to vector<8x32xf32>
    %c0_88 = arith.constant 0 : index
    %c8_89 = arith.constant 8 : index
    %c10 = arith.constant 10 : index
    %c0_90 = arith.constant 0 : index
    %126 = vector.load %arg6[%c0_88, %c8_89, %c10, %c0_90] : memref<1x16x16x64xf32, #tpu.memory_space<vmem>>, vector<1x8x1x32xf32>
    %127 = vector.shape_cast %126 : vector<1x8x1x32xf32> to vector<8x32xf32>
    %128 = vector.shape_cast %125 : vector<8x32xf32> to vector<1x8x1x32xf32>
    tpu.vector_store %arg6[%c0_88, %c8_89, %c10, %c0_90], %128 {strides = array<i32>} : memref<1x16x16x64xf32, #tpu.memory_space<vmem>>, vector<1x8x1x32xf32>,
    %129 = vector.extract_strided_slice %124 {offsets = [8, 0], sizes = [8, 32], strides = [1, 1]} : vector<16x32xf32> to vector<8x32xf32>
    %c0_91 = arith.constant 0 : index
    %c8_92 = arith.constant 8 : index
    %c10_93 = arith.constant 10 : index
    %c32_94 = arith.constant 32 : index
    %130 = vector.load %arg6[%c0_91, %c8_92, %c10_93, %c32_94] : memref<1x16x16x64xf32, #tpu.memory_space<vmem>>, vector<1x8x1x32xf32>
    %131 = vector.shape_cast %130 : vector<1x8x1x32xf32> to vector<8x32xf32>
    %132 = vector.shape_cast %129 : vector<8x32xf32> to vector<1x8x1x32xf32>
    tpu.vector_store %arg6[%c0_91, %c8_92, %c10_93, %c32_94], %132 {strides = array<i32>} : memref<1x16x16x64xf32, #tpu.memory_space<vmem>>, vector<1x8x1x32xf32>,
    %133 = vector.extract_strided_slice %33 {offsets = [0, 352], sizes = [16, 32], strides = [1, 1]} : vector<16x512xf32> to vector<16x32xf32>
    %134 = vector.extract_strided_slice %133 {offsets = [0, 0], sizes = [8, 32], strides = [1, 1]} : vector<16x32xf32> to vector<8x32xf32>
    %c0_95 = arith.constant 0 : index
    %c8_96 = arith.constant 8 : index
    %c11 = arith.constant 11 : index
    %c0_97 = arith.constant 0 : index
    %135 = vector.load %arg6[%c0_95, %c8_96, %c11, %c0_97] : memref<1x16x16x64xf32, #tpu.memory_space<vmem>>, vector<1x8x1x32xf32>
    %136 = vector.shape_cast %135 : vector<1x8x1x32xf32> to vector<8x32xf32>
    %137 = vector.shape_cast %134 : vector<8x32xf32> to vector<1x8x1x32xf32>
    tpu.vector_store %arg6[%c0_95, %c8_96, %c11, %c0_97], %137 {strides = array<i32>} : memref<1x16x16x64xf32, #tpu.memory_space<vmem>>, vector<1x8x1x32xf32>,
    %138 = vector.extract_strided_slice %133 {offsets = [8, 0], sizes = [8, 32], strides = [1, 1]} : vector<16x32xf32> to vector<8x32xf32>
    %c0_98 = arith.constant 0 : index
    %c8_99 = arith.constant 8 : index
    %c11_100 = arith.constant 11 : index
    %c32_101 = arith.constant 32 : index
    %139 = vector.load %arg6[%c0_98, %c8_99, %c11_100, %c32_101] : memref<1x16x16x64xf32, #tpu.memory_space<vmem>>, vector<1x8x1x32xf32>
    %140 = vector.shape_cast %139 : vector<1x8x1x32xf32> to vector<8x32xf32>
    %141 = vector.shape_cast %138 : vector<8x32xf32> to vector<1x8x1x32xf32>
    tpu.vector_store %arg6[%c0_98, %c8_99, %c11_100, %c32_101], %141 {strides = array<i32>} : memref<1x16x16x64xf32, #tpu.memory_space<vmem>>, vector<1x8x1x32xf32>,
    %142 = vector.extract_strided_slice %33 {offsets = [0, 384], sizes = [16, 32], strides = [1, 1]} : vector<16x512xf32> to vector<16x32xf32>
    %143 = vector.extract_strided_slice %142 {offsets = [0, 0], sizes = [8, 32], strides = [1, 1]} : vector<16x32xf32> to vector<8x32xf32>
    %c0_102 = arith.constant 0 : index
    %c8_103 = arith.constant 8 : index
    %c12 = arith.constant 12 : index
    %c0_104 = arith.constant 0 : index
    %144 = vector.load %arg6[%c0_102, %c8_103, %c12, %c0_104] : memref<1x16x16x64xf32, #tpu.memory_space<vmem>>, vector<1x8x1x32xf32>
    %145 = vector.shape_cast %144 : vector<1x8x1x32xf32> to vector<8x32xf32>
    %146 = vector.shape_cast %143 : vector<8x32xf32> to vector<1x8x1x32xf32>
    tpu.vector_store %arg6[%c0_102, %c8_103, %c12, %c0_104], %146 {strides = array<i32>} : memref<1x16x16x64xf32, #tpu.memory_space<vmem>>, vector<1x8x1x32xf32>,
    %147 = vector.extract_strided_slice %142 {offsets = [8, 0], sizes = [8, 32], strides = [1, 1]} : vector<16x32xf32> to vector<8x32xf32>
    %c0_105 = arith.constant 0 : index
    %c8_106 = arith.constant 8 : index
    %c12_107 = arith.constant 12 : index
    %c32_108 = arith.constant 32 : index
    %148 = vector.load %arg6[%c0_105, %c8_106, %c12_107, %c32_108] : memref<1x16x16x64xf32, #tpu.memory_space<vmem>>, vector<1x8x1x32xf32>
    %149 = vector.shape_cast %148 : vector<1x8x1x32xf32> to vector<8x32xf32>
    %150 = vector.shape_cast %147 : vector<8x32xf32> to vector<1x8x1x32xf32>
    tpu.vector_store %arg6[%c0_105, %c8_106, %c12_107, %c32_108], %150 {strides = array<i32>} : memref<1x16x16x64xf32, #tpu.memory_space<vmem>>, vector<1x8x1x32xf32>,
    %151 = vector.extract_strided_slice %33 {offsets = [0, 416], sizes = [16, 32], strides = [1, 1]} : vector<16x512xf32> to vector<16x32xf32>
    %152 = vector.extract_strided_slice %151 {offsets = [0, 0], sizes = [8, 32], strides = [1, 1]} : vector<16x32xf32> to vector<8x32xf32>
    %c0_109 = arith.constant 0 : index
    %c8_110 = arith.constant 8 : index
    %c13 = arith.constant 13 : index
    %c0_111 = arith.constant 0 : index
    %153 = vector.load %arg6[%c0_109, %c8_110, %c13, %c0_111] : memref<1x16x16x64xf32, #tpu.memory_space<vmem>>, vector<1x8x1x32xf32>
    %154 = vector.shape_cast %153 : vector<1x8x1x32xf32> to vector<8x32xf32>
    %155 = vector.shape_cast %152 : vector<8x32xf32> to vector<1x8x1x32xf32>
    tpu.vector_store %arg6[%c0_109, %c8_110, %c13, %c0_111], %155 {strides = array<i32>} : memref<1x16x16x64xf32, #tpu.memory_space<vmem>>, vector<1x8x1x32xf32>,
    %156 = vector.extract_strided_slice %151 {offsets = [8, 0], sizes = [8, 32], strides = [1, 1]} : vector<16x32xf32> to vector<8x32xf32>
    %c0_112 = arith.constant 0 : index
    %c8_113 = arith.constant 8 : index
    %c13_114 = arith.constant 13 : index
    %c32_115 = arith.constant 32 : index
    %157 = vector.load %arg6[%c0_112, %c8_113, %c13_114, %c32_115] : memref<1x16x16x64xf32, #tpu.memory_space<vmem>>, vector<1x8x1x32xf32>
    %158 = vector.shape_cast %157 : vector<1x8x1x32xf32> to vector<8x32xf32>
    %159 = vector.shape_cast %156 : vector<8x32xf32> to vector<1x8x1x32xf32>
    tpu.vector_store %arg6[%c0_112, %c8_113, %c13_114, %c32_115], %159 {strides = array<i32>} : memref<1x16x16x64xf32, #tpu.memory_space<vmem>>, vector<1x8x1x32xf32>,
    %160 = vector.extract_strided_slice %33 {offsets = [0, 448], sizes = [16, 32], strides = [1, 1]} : vector<16x512xf32> to vector<16x32xf32>
    %161 = vector.extract_strided_slice %160 {offsets = [0, 0], sizes = [8, 32], strides = [1, 1]} : vector<16x32xf32> to vector<8x32xf32>
    %c0_116 = arith.constant 0 : index
    %c8_117 = arith.constant 8 : index
    %c14 = arith.constant 14 : index
    %c0_118 = arith.constant 0 : index
    %162 = vector.load %arg6[%c0_116, %c8_117, %c14, %c0_118] : memref<1x16x16x64xf32, #tpu.memory_space<vmem>>, vector<1x8x1x32xf32>
    %163 = vector.shape_cast %162 : vector<1x8x1x32xf32> to vector<8x32xf32>
    %164 = vector.shape_cast %161 : vector<8x32xf32> to vector<1x8x1x32xf32>
    tpu.vector_store %arg6[%c0_116, %c8_117, %c14, %c0_118], %164 {strides = array<i32>} : memref<1x16x16x64xf32, #tpu.memory_space<vmem>>, vector<1x8x1x32xf32>,
    %165 = vector.extract_strided_slice %160 {offsets = [8, 0], sizes = [8, 32], strides = [1, 1]} : vector<16x32xf32> to vector<8x32xf32>
    %c0_119 = arith.constant 0 : index
    %c8_120 = arith.constant 8 : index
    %c14_121 = arith.constant 14 : index
    %c32_122 = arith.constant 32 : index
    %166 = vector.load %arg6[%c0_119, %c8_120, %c14_121, %c32_122] : memref<1x16x16x64xf32, #tpu.memory_space<vmem>>, vector<1x8x1x32xf32>
    %167 = vector.shape_cast %166 : vector<1x8x1x32xf32> to vector<8x32xf32>
    %168 = vector.shape_cast %165 : vector<8x32xf32> to vector<1x8x1x32xf32>
    tpu.vector_store %arg6[%c0_119, %c8_120, %c14_121, %c32_122], %168 {strides = array<i32>} : memref<1x16x16x64xf32, #tpu.memory_space<vmem>>, vector<1x8x1x32xf32>,
    %169 = vector.extract_strided_slice %33 {offsets = [0, 480], sizes = [16, 32], strides = [1, 1]} : vector<16x512xf32> to vector<16x32xf32>
    %170 = vector.extract_strided_slice %169 {offsets = [0, 0], sizes = [8, 32], strides = [1, 1]} : vector<16x32xf32> to vector<8x32xf32>
    %c0_123 = arith.constant 0 : index
    %c8_124 = arith.constant 8 : index
    %c15 = arith.constant 15 : index
    %c0_125 = arith.constant 0 : index
    %171 = vector.load %arg6[%c0_123, %c8_124, %c15, %c0_125] : memref<1x16x16x64xf32, #tpu.memory_space<vmem>>, vector<1x8x1x32xf32>
    %172 = vector.shape_cast %171 : vector<1x8x1x32xf32> to vector<8x32xf32>
    %173 = vector.shape_cast %170 : vector<8x32xf32> to vector<1x8x1x32xf32>
    tpu.vector_store %arg6[%c0_123, %c8_124, %c15, %c0_125], %173 {strides = array<i32>} : memref<1x16x16x64xf32, #tpu.memory_space<vmem>>, vector<1x8x1x32xf32>,
    %174 = vector.extract_strided_slice %169 {offsets = [8, 0], sizes = [8, 32], strides = [1, 1]} : vector<16x32xf32> to vector<8x32xf32>
    %c0_126 = arith.constant 0 : index
    %c8_127 = arith.constant 8 : index
    %c15_128 = arith.constant 15 : index
    %c32_129 = arith.constant 32 : index
    %175 = vector.load %arg6[%c0_126, %c8_127, %c15_128, %c32_129] : memref<1x16x16x64xf32, #tpu.memory_space<vmem>>, vector<1x8x1x32xf32>
    %176 = vector.shape_cast %175 : vector<1x8x1x32xf32> to vector<8x32xf32>
    %177 = vector.shape_cast %174 : vector<8x32xf32> to vector<1x8x1x32xf32>
    tpu.vector_store %arg6[%c0_126, %c8_127, %c15_128, %c32_129], %177 {strides = array<i32>} : memref<1x16x16x64xf32, #tpu.memory_space<vmem>>, vector<1x8x1x32xf32>,
    return
  }
  func.func @transform_0(%arg0: i32, %arg1: i32) -> (i32, i32, i32) {
    %c0_i32 = arith.constant 0 : i32
    %c0_i32_0 = arith.constant 0 : i32
    return %arg0, %c0_i32, %arg1 : i32, i32, i32
  }
  func.func @transform_1(%arg0: i32, %arg1: i32) -> (i32, i32) {
    %c0_i32 = arith.constant 0 : i32
    %c0_i32_0 = arith.constant 0 : i32
    %c0_i32_1 = arith.constant 0 : i32
    return %c0_i32, %c0_i32_0 : i32, i32
  }
  func.func @transform_2(%arg0: i32, %arg1: i32) -> (i32, i32) {
    %c0_i32 = arith.constant 0 : i32
    %c0_i32_0 = arith.constant 0 : i32
    %c0_i32_1 = arith.constant 0 : i32
    return %c0_i32, %c0_i32_0 : i32, i32
  }
  func.func @transform_3(%arg0: i32, %arg1: i32) -> (i32, i32, i32, i32) {
    %c0_i32 = arith.constant 0 : i32
    %c0_i32_0 = arith.constant 0 : i32
    %c0_i32_1 = arith.constant 0 : i32
    return %arg0, %c0_i32, %arg1, %c0_i32_0 : i32, i32, i32, i32
  }
  func.func @transform_4(%arg0: i32, %arg1: i32) -> (i32, i32, i32, i32) {
    %c0_i32 = arith.constant 0 : i32
    %c0_i32_0 = arith.constant 0 : i32
    %c0_i32_1 = arith.constant 0 : i32
    return %arg0, %c0_i32, %arg1, %c0_i32_0 : i32, i32, i32, i32
  }
}

</mosaic_0001>

<llo_original>
// kernel: tpu_custom_call.1
$region0: #{tpu_custom_call.1}
  #allocation0 [shape = 'u32[]', space=smem, size = 0x4, offset = 0x4, fixed_abs, tag = 'smem constant byte address 0x4 - core index']
  #allocation1 [shape = 'u32[144,128]{1,0:T(1,128)}', space=vmem, size = 0x12000, scoped, tag = 'internal scratch']
  %s0 = inlined_call_operand.vmem [shape: f32[2,4,512], index: 0, kind: input, shape index: {}]
  %s1 = inlined_call_operand.vmem [shape: f32[32,4], index: 1, kind: input, shape index: {}]
  %s2 = inlined_call_operand.vmem [shape: f32[16,1], index: 2, kind: input, shape index: {}]
  %s3 = inlined_call_operand.hbm [shape: f32[2,8,16,64], index: 3, kind: input, shape index: {}]
  %s4 = inlined_call_operand.hbm [shape: f32[2,16,16,64], index: 4, kind: output, shape index: {}]
  %s5 = sld [smem:[#allocation0]]
  $region53: #{tpu_custom_call.1} parent=0
    _
  %s7 = ssub.s32 1, %s5
  %s8 = scalar_select 0, %s7, %s5
  $region1: #{tpu_custom_call.1} parent=0
    #allocation2 [shape = 'u8[131072]{0}', space=vmem, size = 0x20000, scoped, tag = 'input window, operand 3']
    #allocation3 [shape = 's32[2]{0}', space=sflag, size = 0x8, scoped, tag = 'scoped memory for tpu_custom_call.1']
    #allocation4 [shape = 's32[2]{0}', space=sflag, size = 0x8, scoped, tag = 'scoped memory for tpu_custom_call.1']
    #allocation5 [shape = 'u8[262144]{0}', space=vmem, size = 0x40000, scoped, tag = 'output window, operand 0']
    %9 = vsyncpa [#allocation3], 0
    %s10 = scalar_lea.sflag [#allocation3], 1
    %11 = vsyncpa %s10, 0
    %12 = vsyncpa [#allocation4], 0
    %s13 = scalar_lea.sflag [#allocation4], 1
    %14 = vsyncpa %s13, 0
    loop: start=0, step=1, limit=4
    $region2: #{tpu_custom_call.1} parent=1 // loop_pre_header
      _
    $region3: #{tpu_custom_call.1} parent=1 // loop_header
      %s16 = sphi 0, %s20
      %p17 = scmp.ge.s32.totalorder %s16, 4
      %s23 = sphi 0, %s35
      %s24 = sphi 0, %s31
      %s25 = sphi 0, %s23
      %s26 = sphi 0, %s24
      %s27 = sphi 0, %s25
      %s28 = sphi 0, %s26
      %s40 = sphi 0, %s42
      %s43 = sphi 0, %s40
      %s44 = sphi 0, %s43
      %s60 = sphi 0, %s44
      %s64 = sphi 0, %s64
      %s66 = sphi 0, %s64
      %s67 = sphi 0, %s66
      %s81 = sphi 0, %s67
      %s85 = sphi 0, %s85
      %s87 = sphi 0, %s85
      %s88 = sphi 0, %s87
      %s102 = sphi 0, %s88
      %s110 = sphi 0, %s112
      %s113 = sphi 0, %s110
      %s114 = sphi 0, %s113
      %s130 = sphi 0, %s114
      %s138 = sphi 0, %s140
      %s141 = sphi 0, %s138
      %s142 = sphi 0, %s141
      %s158 = sphi 0, %s142
    $region4: #{tpu_custom_call.1} parent=1 // loop_header_branch
      %19 = sbr.rel (%p17) target = $region8
    $region5: #{tpu_custom_call.1} parent=1 // loop_body
      %s21 = ssub.s32 %s16, 1
      %s22 = ssub.s32 %s16, 2
      %s29 = sadd.s32 1, %s24
      %p30 = scmp.ge.s32.totalorder %s29, 1
      %s31 = scalar_select %p30, 0, %s29
      %s32 = sadd.s32 1, %s23
      %s33 = scalar_select %p30, %s32, %s23
      %p34 = scmp.ge.s32.totalorder %s33, 2
      %s35 = scalar_select %p34, 0, %s33
      %s36 = ssub.s32 %s23, %s35
      %s37 = ssub.s32 %s24, %s31
      %s38 = sor.u32 %s36, %s37
      %p39 = scmp.eq.s32.totalorder %s38, 0
      %s41 = sadd.s32 %s40, 1
      %s42 = scalar_select %p39, %s40, %s41
      %p45 = pneg %p39
      %p46 = scmp.eq.s32.totalorder %s16, 1
      %p47 = por %p45, %p46
      %p48 = scmp.ne.s32.totalorder %s40, %s43
      %p49 = scmp.eq.s32.totalorder %s16, 0
      %p50 = por %p48, %p49
      %p51 = scmp.ne.s32.totalorder %s40, %s43
      %p52 = scmp.eq.s32.totalorder %s21, 1
      %p53 = por %p51, %p52
      %p54 = scmp.ne.s32.totalorder %s43, %s44
      %p55 = scmp.eq.s32.totalorder %s21, 0
      %p56 = por %p54, %p55
      %p57 = scmp.ne.s32.totalorder %s43, %s44
      %p58 = scmp.eq.s32.totalorder %s22, 1
      %p59 = por %p57, %p58
      %p61 = scmp.ne.s32.totalorder %s44, %s60
      %p62 = scmp.eq.s32.totalorder %s22, 0
      %p63 = por %p61, %p62
      %s65 = sadd.s32 %s64, 1
      %p68 = scmp.eq.s32.totalorder %s16, 1
      %p69 = scmp.ne.s32.totalorder %s64, %s66
      %p70 = scmp.eq.s32.totalorder %s16, 0
      %p71 = por %p69, %p70
      %p72 = scmp.ne.s32.totalorder %s64, %s66
      %p73 = scmp.eq.s32.totalorder %s21, 1
      %p74 = por %p72, %p73
      %p75 = scmp.ne.s32.totalorder %s66, %s67
      %p76 = scmp.eq.s32.totalorder %s21, 0
      %p77 = por %p75, %p76
      %p78 = scmp.ne.s32.totalorder %s66, %s67
      %p79 = scmp.eq.s32.totalorder %s22, 1
      %p80 = por %p78, %p79
      %p82 = scmp.ne.s32.totalorder %s67, %s81
      %p83 = scmp.eq.s32.totalorder %s22, 0
      %p84 = por %p82, %p83
      %s86 = sadd.s32 %s85, 1
      %p89 = scmp.eq.s32.totalorder %s16, 1
      %p90 = scmp.ne.s32.totalorder %s85, %s87
      %p91 = scmp.eq.s32.totalorder %s16, 0
      %p92 = por %p90, %p91
      %p93 = scmp.ne.s32.totalorder %s85, %s87
      %p94 = scmp.eq.s32.totalorder %s21, 1
      %p95 = por %p93, %p94
      %p96 = scmp.ne.s32.totalorder %s87, %s88
      %p97 = scmp.eq.s32.totalorder %s21, 0
      %p98 = por %p96, %p97
      %p99 = scmp.ne.s32.totalorder %s87, %s88
      %p100 = scmp.eq.s32.totalorder %s22, 1
      %p101 = por %p99, %p100
      %p103 = scmp.ne.s32.totalorder %s88, %s102
      %p104 = scmp.eq.s32.totalorder %s22, 0
      %p105 = por %p103, %p104
      %s106 = ssub.s32 %s23, %s35
      %s107 = ssub.s32 %s24, %s31
      %s108 = sor.u32 %s106, %s107
      %p109 = scmp.eq.s32.totalorder %s108, 0
      %s111 = sadd.s32 %s110, 1
      %s112 = scalar_select %p109, %s110, %s111
      %p115 = pneg %p109
      %p116 = scmp.eq.s32.totalorder %s16, 1
      %p117 = por %p115, %p116
      %p118 = scmp.ne.s32.totalorder %s110, %s113
      %p119 = scmp.eq.s32.totalorder %s16, 0
      %p120 = por %p118, %p119
      %p121 = scmp.ne.s32.totalorder %s110, %s113
      %p122 = scmp.eq.s32.totalorder %s21, 1
      %p123 = por %p121, %p122
      %p124 = scmp.ne.s32.totalorder %s113, %s114
      %p125 = scmp.eq.s32.totalorder %s21, 0
      %p126 = por %p124, %p125
      %p127 = scmp.ne.s32.totalorder %s113, %s114
      %p128 = scmp.eq.s32.totalorder %s22, 1
      %p129 = por %p127, %p128
      %p131 = scmp.ne.s32.totalorder %s114, %s130
      %p132 = scmp.eq.s32.totalorder %s22, 0
      %p133 = por %p131, %p132
      %s134 = ssub.s32 %s23, %s35
      %s135 = ssub.s32 %s24, %s31
      %s136 = sor.u32 %s134, %s135
      %p137 = scmp.eq.s32.totalorder %s136, 0
      %s139 = sadd.s32 %s138, 1
      %s140 = scalar_select %p137, %s138, %s139
      %p143 = pneg %p137
      %p144 = scmp.eq.s32.totalorder %s16, 1
      %p145 = por %p143, %p144
      %p146 = scmp.ne.s32.totalorder %s138, %s141
      %p147 = scmp.eq.s32.totalorder %s16, 0
      %p148 = por %p146, %p147
      %p149 = scmp.ne.s32.totalorder %s138, %s141
      %p150 = scmp.eq.s32.totalorder %s21, 1
      %p151 = por %p149, %p150
      %p152 = scmp.ne.s32.totalorder %s141, %s142
      %p153 = scmp.eq.s32.totalorder %s21, 0
      %p154 = por %p152, %p153
      %p155 = scmp.ne.s32.totalorder %s141, %s142
      %p156 = scmp.eq.s32.totalorder %s22, 1
      %p157 = por %p155, %p156
      %p159 = scmp.ne.s32.totalorder %s142, %s158
      %p160 = scmp.eq.s32.totalorder %s22, 0
      %p161 = por %p159, %p160
      %p162 = scmp.le.s32.totalorder 1, %s16
      %p163 = scmp.lt.s32.totalorder %s16, 3
      %p164 = pnand %p162, %p163
      %p165 = pneg %p164
      // Predicated region
      $region9: #{tpu_custom_call.1} parent=5 // pred_check
        _
      $region10: #{tpu_custom_call.1} parent=5 // pred_check_branch
        %167 = sbr.rel (%p164) target = $region12
      $region11: #{tpu_custom_call.1} parent=5 // pred_region
        %s168 = ssub.s32 %s16, 1
        // Predicated region
        $region13: #{tpu_custom_call.1} parent=11 // pred_check
          %p169 = pneg %p77
        $region14: #{tpu_custom_call.1} parent=11 // pred_check_branch
          %171 = sbr.rel (%p169) target = $region16
        $region15: #{tpu_custom_call.1} parent=11 // pred_region
          _
        $region16: #{tpu_custom_call.1} parent=11 // pred_fallthru
          _
        // Predicated region
        $region17: #{tpu_custom_call.1} parent=11 // pred_check
          %p172 = pneg %p98
        $region18: #{tpu_custom_call.1} parent=11 // pred_check_branch
          %174 = sbr.rel (%p172) target = $region20
        $region19: #{tpu_custom_call.1} parent=11 // pred_region
          _
        $region20: #{tpu_custom_call.1} parent=11 // pred_fallthru
          _
      $region12: #{tpu_custom_call.1} parent=5 // pred_fallthru
        _
      %p175 = scmp.lt.s32.totalorder %s16, 2
      // Predicated region
      $region21: #{tpu_custom_call.1} parent=5 // pred_check
        %p176 = pneg %p175
      $region22: #{tpu_custom_call.1} parent=5 // pred_check_branch
        %178 = sbr.rel (%p176) target = $region24
      $region23: #{tpu_custom_call.1} parent=5 // pred_region
        // Predicated region
        $region25: #{tpu_custom_call.1} parent=23 // pred_check
          %p179 = pneg %p50
        $region26: #{tpu_custom_call.1} parent=23 // pred_check_branch
          %181 = sbr.rel (%p179) target = $region28
        $region27: #{tpu_custom_call.1} parent=23 // pred_region
          %s182 = smul.u32 4, %s24
          %p183 = scmp.lt.s32.totalorder %s23, 1
          %s184 = scalar_select %p183, %s23, 1
          %p185 = scmp.lt.s32.totalorder %s182, 3
          %s186 = scalar_select %p185, %s182, 3
          %s187 = smul.addr %s184, 4
          %s188 = sadd.s32 %s186, %s187
          %s189 = smul.addr %s188, 4
          %s190 = scalar_lea.vmem %s0, %s189
          %s191 = smul.u32 4, %s24
        $region28: #{tpu_custom_call.1} parent=23 // pred_fallthru
          _
        // Predicated region
        $region29: #{tpu_custom_call.1} parent=23 // pred_check
          %p192 = pneg %p120
        $region30: #{tpu_custom_call.1} parent=23 // pred_check_branch
          %194 = sbr.rel (%p192) target = $region32
        $region31: #{tpu_custom_call.1} parent=23 // pred_region
          %s195 = sand.u32 %s110, 1
          %s196 = scalar_lea.sflag [#allocation3], %s195
          %s197 = sand.u32 %s110, 1
          %s198 = smul.addr %s197, 128
          %s199 = scalar_lea.vmem [#allocation2], %s198
          %s200 = smul.u32 2, %s24
          %s202 = ssub.s32 2048, 2048
          %203 = vsyncadd %s196, %s202
          %s204 = smul.addr %s23, 16
          %s205 = sadd.s32 %s200, %s204
          %s206 = smul.addr %s205, 128
          %s207 = scalar_lea.hbm %s3, %s206
          %s208 = sshll.u32 %s199, 4
          %s209 = int_to_ptr.vmem [resolvable:$true] %s208
          %214 = dma.hbm_to_vmem [thread:$0]  %s207, 2048, %s209, %s196, 128, 128, 8
        $region32: #{tpu_custom_call.1} parent=23 // pred_fallthru
          _
      $region24: #{tpu_custom_call.1} parent=5 // pred_fallthru
        _
      %p215 = scmp.le.s32.totalorder 1, %s16
      %p216 = scmp.lt.s32.totalorder %s16, 3
      %p217 = pnand %p215, %p216
      %p218 = pneg %p217
      // Predicated region
      $region33: #{tpu_custom_call.1} parent=5 // pred_check
        _
      $region34: #{tpu_custom_call.1} parent=5 // pred_check_branch
        %220 = sbr.rel (%p217) target = $region36
      $region35: #{tpu_custom_call.1} parent=5 // pred_region
        %s221 = ssub.s32 %s16, 1
        %s222 = sand.u32 %s113, 1
        %s223 = scalar_lea.sflag [#allocation3], %s222
        %s224 = sand.u32 %s113, 1
        %s225 = smul.addr %s224, 128
        %s226 = scalar_lea.vmem [#allocation2], %s225
        // Predicated region
        $region37: #{tpu_custom_call.1} parent=35 // pred_check
          %p227 = pneg %p126
        $region38: #{tpu_custom_call.1} parent=35 // pred_check_branch
          %229 = sbr.rel (%p227) target = $region40
        $region39: #{tpu_custom_call.1} parent=35 // pred_region
          %230 = dma.done %s223, 2048
        $region40: #{tpu_custom_call.1} parent=35 // pred_fallthru
          _
        %s231 = smul.u32 4, %s26
        %p232 = scmp.lt.s32.totalorder %s25, 1
        %s233 = scalar_select %p232, %s25, 1
        %p234 = scmp.lt.s32.totalorder %s231, 3
        %s235 = scalar_select %p234, %s231, 3
        %s236 = smul.addr %s233, 4
        %s237 = sadd.s32 %s235, %s236
        %s238 = smul.addr %s237, 4
        %s239 = scalar_lea.vmem %s0, %s238
        %p240 = pneg %p56
        %p241 = pneg %p53
        %p242 = pneg %p77
        %p243 = pneg %p74
        %p244 = pneg %p98
        %p245 = pneg %p95
        %s246 = sand.u32 %s113, 1
        %s247 = scalar_lea.sflag [#allocation3], %s246
        %s248 = sand.u32 %s113, 1
        %s249 = smul.addr %s248, 128
        %s250 = scalar_lea.vmem [#allocation2], %s249
        %p251 = pneg %p126
        %p252 = pneg %p123
        %p253 = pneg %p154
        %p254 = pneg %p151
        %s255 = sand.u32 %s141, 1
        %s256 = scalar_lea.sflag [#allocation4], %s255
        %s257 = sand.u32 %s141, 1
        %s258 = smul.addr %s257, 256
        %s259 = scalar_lea.vmem [#allocation5], %s258
        %s260 = smul.u32 4, %s26
        %p261 = scmp.lt.s32.totalorder %s25, 1
        %s262 = scalar_select %p261, %s25, 1
        %p263 = scmp.lt.s32.totalorder %s260, 3
        %s264 = scalar_select %p263, %s260, 3
        %s265 = smul.addr %s262, 4
        %s266 = sadd.s32 %s264, %s265
        %s267 = smul.addr %s266, 4
        %s268 = scalar_lea.vmem %s0, %s267
        %s269 = smul.u32 4, %s26
        %s270 = smul.u32 2, %s26
        %s271 = smul.u32 2, %s26
        %v272 = vld [vmem:[%s226] sm:$0xff]
        %v273 = vld [vmem:[%s226 + $0x8] sm:$0xff]
        %v274 = vld [vmem:[%s226 + $0x10] sm:$0xff]
        %v275 = vld [vmem:[%s226 + $0x18] sm:$0xff]
        %v276 = vld [vmem:[%s226 + $0x20] sm:$0xff]
        %v277 = vld [vmem:[%s226 + $0x28] sm:$0xff]
        %v278 = vld [vmem:[%s226 + $0x30] sm:$0xff]
        %v279 = vld [vmem:[%s226 + $0x38] sm:$0xff]
        %v280 = vld [vmem:[%s226 + $0x40] sm:$0xff]
        %v281 = vld [vmem:[%s226 + $0x48] sm:$0xff]
        %v282 = vld [vmem:[%s226 + $0x50] sm:$0xff]
        %v283 = vld [vmem:[%s226 + $0x58] sm:$0xff]
        %v284 = vld [vmem:[%s226 + $0x60] sm:$0xff]
        %v285 = vld [vmem:[%s226 + $0x68] sm:$0xff]
        %v286 = vld [vmem:[%s226 + $0x70] sm:$0xff]
        %v287 = vld [vmem:[%s226 + $0x78] sm:$0xff]
        %vm288 = vcmask 523264
        %289 = vst.msk [vmem:[%s259] sm:$0xff] %vm288, %v272
        %290 = vst.msk [vmem:[%s259 + $0x8] sm:$0xff] %vm288, %v273
        %291 = vst.msk [vmem:[%s259 + $0x10] sm:$0xff] %vm288, %v274
        %292 = vst.msk [vmem:[%s259 + $0x18] sm:$0xff] %vm288, %v275
        %293 = vst.msk [vmem:[%s259 + $0x20] sm:$0xff] %vm288, %v276
        %294 = vst.msk [vmem:[%s259 + $0x28] sm:$0xff] %vm288, %v277
        %295 = vst.msk [vmem:[%s259 + $0x30] sm:$0xff] %vm288, %v278
        %296 = vst.msk [vmem:[%s259 + $0x38] sm:$0xff] %vm288, %v279
        %297 = vst.msk [vmem:[%s259 + $0x40] sm:$0xff] %vm288, %v280
        %298 = vst.msk [vmem:[%s259 + $0x48] sm:$0xff] %vm288, %v281
        %299 = vst.msk [vmem:[%s259 + $0x50] sm:$0xff] %vm288, %v282
        %300 = vst.msk [vmem:[%s259 + $0x58] sm:$0xff] %vm288, %v283
        %301 = vst.msk [vmem:[%s259 + $0x60] sm:$0xff] %vm288, %v284
        %302 = vst.msk [vmem:[%s259 + $0x68] sm:$0xff] %vm288, %v285
        %303 = vst.msk [vmem:[%s259 + $0x70] sm:$0xff] %vm288, %v286
        %304 = vst.msk [vmem:[%s259 + $0x78] sm:$0xff] %vm288, %v287
        %v305 = vld [vmem:[%s1] sm:$0xff]
        %v306 = vld [vmem:[%s1 + $0x8] sm:$0xff]
        %v307 = vld [vmem:[%s1 + $0x10] sm:$0xff]
        %v308 = vld [vmem:[%s1 + $0x18] sm:$0xff]
        %v309 = vld [vmem:[%s268] sm:$0xff]
        %v310 = vld [vmem:[%s268 + $0x8] sm:$0xff]
        %v313 = vcombine.high %v309, %v309
        %v314 = vcombine.high %v310, %v310
        %vm315 = vcmask 31744
        %v317 = vsel %vm315, %v305, 0
        %v320 = vsel %vm315, %v306, 0
        %v323 = vsel %vm315, %v307, 0
        %v326 = vsel %vm315, %v308, 0
        %vm328 = vcmask 1043456
        %v329 = vsel %vm328, %v309, 0
        %v331 = vsel %vm328, %v313, 0
        %v333 = vsel %vm328, %v310, 0
        %v335 = vsel %vm328, %v314, 0
        %337 = vmatprep.subr.mxu0 %v331
        %338 = vmatpush1.msra.mxu0 %v329
        %339 = vmatprep.subr.mxu0 0.0
        %340 = vmatpush1.msra.mxu0 0.0
        %341 = vmatprep.subr.mxu0 0.0
        %342 = vmatpush1.msra.mxu0 0.0
        %343 = vmatprep.subr.mxu0 0.0
        %344 = vmatpush1.msra.mxu0 0.0
        %345 = vmatprep.subr.mxu0 0.0
        %346 = vmatpush1.msra.mxu0 0.0
        %347 = vmatprep.subr.mxu0 0.0
        %348 = vmatpush1.msra.mxu0 0.0
        %349 = vmatprep.subr.mxu0 0.0
        %350 = vmatpush1.msra.mxu0 0.0
        %351 = vmatprep.subr.mxu0 0.0
        %352 = vmatpush1.msra.mxu0 0.0
        %353 = vmatprep.subr.mxu0 0.0
        %354 = vmatpush1.msra.mxu0 0.0
        %355 = vmatprep.subr.mxu0 0.0
        %356 = vmatpush1.msra.mxu0 0.0
        %357 = vmatprep.subr.mxu0 0.0
        %358 = vmatpush1.msra.mxu0 0.0
        %359 = vmatprep.subr.mxu0 0.0
        %360 = vmatpush1.msra.mxu0 0.0
        %361 = vmatprep.subr.mxu0 0.0
        %362 = vmatpush1.msra.mxu0 0.0
        %363 = vmatprep.subr.mxu0 0.0
        %364 = vmatpush1.msra.mxu0 0.0
        %365 = vmatprep.subr.mxu0 0.0
        %366 = vmatpush1.msra.mxu0 0.0
        %367 = vmatprep.subr.mxu0 0.0
        %368 = vmatpush1.msra.mxu0 0.0
        %369 = vmatprep.subr.mxu0 0.0
        %370 = vmatpush1.msra.mxu0 0.0
        %371 = vmatprep.subr.mxu0 0.0
        %372 = vmatpush1.msra.mxu0 0.0
        %373 = vmatprep.subr.mxu0 0.0
        %374 = vmatpush1.msra.mxu0 0.0
        %375 = vmatprep.subr.mxu0 0.0
        %376 = vmatpush1.msra.mxu0 0.0
        %377 = vmatprep.subr.mxu0 0.0
        %378 = vmatpush1.msra.mxu0 0.0
        %379 = vmatprep.subr.mxu0 0.0
        %380 = vmatpush1.msra.mxu0 0.0
        %381 = vmatprep.subr.mxu0 0.0
        %382 = vmatpush1.msra.mxu0 0.0
        %383 = vmatprep.subr.mxu0 0.0
        %384 = vmatpush1.msra.mxu0 0.0
        %385 = vmatprep.subr.mxu0 0.0
        %386 = vmatpush1.msra.mxu0 0.0
        %387 = vmatprep.subr.mxu0 0.0
        %388 = vmatpush1.msra.mxu0 0.0
        %389 = vmatprep.subr.mxu0 0.0
        %390 = vmatpush1.msra.mxu0 0.0
        %391 = vmatprep.subr.mxu0 0.0
        %392 = vmatpush1.msra.mxu0 0.0
        %393 = vmatprep.subr.mxu0 0.0
        %394 = vmatpush1.msra.mxu0 0.0
        %395 = vmatprep.subr.mxu0 0.0
        %396 = vmatpush1.msra.mxu0 0.0
        %397 = vmatprep.subr.mxu0 0.0
        %398 = vmatpush1.msra.mxu0 0.0
        %399 = vmatprep.subr.mxu0 0.0
        %400 = vmatpush1.msra.mxu0 0.0
        %401 = vmatprep.mubr.f32.mxu0 0.0
        %402 = vmatmul.mubr.f32.gmra.mrb[0].mxu0 %v317
        %v403 = vpop.f32.mrb[0].mxu0
        %v404 = vadd.f32 0.0, %v403
        %v405 = vpop.f32.mrb[0].mxu0
        %v406 = vadd.f32 0.0, %v405
        %407 = vmatprep.mubr.f32.mxu0 0.0
        %408 = vmatmul.mubr.f32.gmra.mrb[0].mxu0 %v320
        %v409 = vpop.f32.mrb[0].mxu0
        %v410 = vadd.f32 0.0, %v409
        %v411 = vpop.f32.mrb[0].mxu0
        %v412 = vadd.f32 0.0, %v411
        %413 = vmatprep.mubr.f32.mxu0 0.0
        %414 = vmatmul.mubr.f32.gmra.mrb[0].mxu0 %v323
        %v415 = vpop.f32.mrb[0].mxu0
        %v416 = vadd.f32 0.0, %v415
        %v417 = vpop.f32.mrb[0].mxu0
        %v418 = vadd.f32 0.0, %v417
        %419 = vmatprep.mubr.f32.mxu0 0.0
        %420 = vmatmul.mubr.f32.gmra.mrb[0].mxu0 %v326
        %v421 = vpop.f32.mrb[0].mxu0
        %v422 = vadd.f32 0.0, %v421
        %v423 = vpop.f32.mrb[0].mxu0
        %v424 = vadd.f32 0.0, %v423
        %425 = vdwg.mxu0
        %426 = vmatprep.subr.mxu0 %v335
        %427 = vmatpush1.msra.mxu0 %v333
        %428 = vmatprep.subr.mxu0 0.0
        %429 = vmatpush1.msra.mxu0 0.0
        %430 = vmatprep.subr.mxu0 0.0
        %431 = vmatpush1.msra.mxu0 0.0
        %432 = vmatprep.subr.mxu0 0.0
        %433 = vmatpush1.msra.mxu0 0.0
        %434 = vmatprep.subr.mxu0 0.0
        %435 = vmatpush1.msra.mxu0 0.0
        %436 = vmatprep.subr.mxu0 0.0
        %437 = vmatpush1.msra.mxu0 0.0
        %438 = vmatprep.subr.mxu0 0.0
        %439 = vmatpush1.msra.mxu0 0.0
        %440 = vmatprep.subr.mxu0 0.0
        %441 = vmatpush1.msra.mxu0 0.0
        %442 = vmatprep.subr.mxu0 0.0
        %443 = vmatpush1.msra.mxu0 0.0
        %444 = vmatprep.subr.mxu0 0.0
        %445 = vmatpush1.msra.mxu0 0.0
        %446 = vmatprep.subr.mxu0 0.0
        %447 = vmatpush1.msra.mxu0 0.0
        %448 = vmatprep.subr.mxu0 0.0
        %449 = vmatpush1.msra.mxu0 0.0
        %450 = vmatprep.subr.mxu0 0.0
        %451 = vmatpush1.msra.mxu0 0.0
        %452 = vmatprep.subr.mxu0 0.0
        %453 = vmatpush1.msra.mxu0 0.0
        %454 = vmatprep.subr.mxu0 0.0
        %455 = vmatpush1.msra.mxu0 0.0
        %456 = vmatprep.subr.mxu0 0.0
        %457 = vmatpush1.msra.mxu0 0.0
        %458 = vmatprep.subr.mxu0 0.0
        %459 = vmatpush1.msra.mxu0 0.0
        %460 = vmatprep.subr.mxu0 0.0
        %461 = vmatpush1.msra.mxu0 0.0
        %462 = vmatprep.subr.mxu0 0.0
        %463 = vmatpush1.msra.mxu0 0.0
        %464 = vmatprep.subr.mxu0 0.0
        %465 = vmatpush1.msra.mxu0 0.0
        %466 = vmatprep.subr.mxu0 0.0
        %467 = vmatpush1.msra.mxu0 0.0
        %468 = vmatprep.subr.mxu0 0.0
        %469 = vmatpush1.msra.mxu0 0.0
        %470 = vmatprep.subr.mxu0 0.0
        %471 = vmatpush1.msra.mxu0 0.0
        %472 = vmatprep.subr.mxu0 0.0
        %473 = vmatpush1.msra.mxu0 0.0
        %474 = vmatprep.subr.mxu0 0.0
        %475 = vmatpush1.msra.mxu0 0.0
        %476 = vmatprep.subr.mxu0 0.0
        %477 = vmatpush1.msra.mxu0 0.0
        %478 = vmatprep.subr.mxu0 0.0
        %479 = vmatpush1.msra.mxu0 0.0
        %480 = vmatprep.subr.mxu0 0.0
        %481 = vmatpush1.msra.mxu0 0.0
        %482 = vmatprep.subr.mxu0 0.0
        %483 = vmatpush1.msra.mxu0 0.0
        %484 = vmatprep.subr.mxu0 0.0
        %485 = vmatpush1.msra.mxu0 0.0
        %486 = vmatprep.subr.mxu0 0.0
        %487 = vmatpush1.msra.mxu0 0.0
        %488 = vmatprep.subr.mxu0 0.0
        %489 = vmatpush1.msra.mxu0 0.0
        %490 = vmatprep.mubr.f32.mxu0 0.0
        %491 = vmatmul.mubr.f32.gmra.mrb[0].mxu0 %v317
        %v492 = vpop.f32.mrb[0].mxu0
        %v493 = vadd.f32 0.0, %v492
        %v494 = vpop.f32.mrb[0].mxu0
        %v495 = vadd.f32 0.0, %v494
        %496 = vmatprep.mubr.f32.mxu0 0.0
        %497 = vmatmul.mubr.f32.gmra.mrb[0].mxu0 %v320
        %v498 = vpop.f32.mrb[0].mxu0
        %v499 = vadd.f32 0.0, %v498
        %v500 = vpop.f32.mrb[0].mxu0
        %v501 = vadd.f32 0.0, %v500
        %502 = vmatprep.mubr.f32.mxu0 0.0
        %503 = vmatmul.mubr.f32.gmra.mrb[0].mxu0 %v323
        %v504 = vpop.f32.mrb[0].mxu0
        %v505 = vadd.f32 0.0, %v504
        %v506 = vpop.f32.mrb[0].mxu0
        %v507 = vadd.f32 0.0, %v506
        %508 = vmatprep.mubr.f32.mxu0 0.0
        %509 = vmatmul.mubr.f32.gmra.mrb[0].mxu0 %v326
        %v510 = vpop.f32.mrb[0].mxu0
        %v511 = vadd.f32 0.0, %v510
        %v512 = vpop.f32.mrb[0].mxu0
        %v513 = vadd.f32 0.0, %v512
        %514 = vdwg.mxu0
        %v515 = vlaneseq
        %v516 = vand.u32 %v515, 127
        %v517 = vadd.s32 %v516, 128
        %v518 = vadd.s32 %v516, 256
        %v519 = vadd.s32 %v516, 384
        %vm520 = vcmp.lt.s32.totalorder %v516, 0
        %v521 = vsub.s32 0, %v516
        %v522 = vsel %vm520, %v521, %v516
        %v523 = vshrl.u32 %v522, 1
        %v524 = vand.u32 %v522, 1
        %v525 = vsub.s32 0, %v524
        %v526 = vsel %vm520, %v525, %v524
        %vm527 = vcmp.lt.s32.totalorder %v517, 0
        %v528 = vsub.s32 0, %v517
        %v529 = vsel %vm527, %v528, %v517
        %v530 = vshrl.u32 %v529, 1
        %v531 = vand.u32 %v529, 1
        %v532 = vsub.s32 0, %v531
        %v533 = vsel %vm527, %v532, %v531
        %vm534 = vcmp.lt.s32.totalorder %v518, 0
        %v535 = vsub.s32 0, %v518
        %v536 = vsel %vm534, %v535, %v518
        %v537 = vshrl.u32 %v536, 1
        %v538 = vand.u32 %v536, 1
        %v539 = vsub.s32 0, %v538
        %v540 = vsel %vm534, %v539, %v538
        %vm541 = vcmp.lt.s32.totalorder %v519, 0
        %v542 = vsub.s32 0, %v519
        %v543 = vsel %vm541, %v542, %v519
        %v544 = vshrl.u32 %v543, 1
        %v545 = vand.u32 %v543, 1
        %v546 = vsub.s32 0, %v545
        %v547 = vsel %vm541, %v546, %v545
        %vm548 = vcmp.ne.s32.totalorder %v526, 0
        %vm549 = vcmp.ne.s32.totalorder %v533, 0
        %vm550 = vcmp.ne.s32.totalorder %v540, 0
        %vm551 = vcmp.ne.s32.totalorder %v547, 0
        %vm552 = vcmp.lt.s32.totalorder %v526, 0
        %vm553 = vcmp.lt.s32.totalorder %v533, 0
        %vm554 = vcmp.lt.s32.totalorder %v540, 0
        %vm555 = vcmp.lt.s32.totalorder %v547, 0
        %vm556 = vmand %vm552, %vm548
        %vm557 = vmand %vm553, %vm549
        %vm558 = vmand %vm554, %vm550
        %vm559 = vmand %vm555, %vm551
        %v560 = vadd.s32 %v526, 2
        %v561 = vadd.s32 %v533, 2
        %v562 = vadd.s32 %v540, 2
        %v563 = vadd.s32 %v547, 2
        %v564 = vsel %vm556, %v560, %v526
        %v565 = vsel %vm557, %v561, %v533
        %v566 = vsel %vm558, %v562, %v540
        %v567 = vsel %vm559, %v563, %v547
        %vm568 = vcmp.eq.s32.totalorder %v564, 0
        %vm569 = vcmp.eq.s32.totalorder %v565, 0
        %vm570 = vcmp.eq.s32.totalorder %v566, 0
        %vm571 = vcmp.eq.s32.totalorder %v567, 0
        %v572 = vsel %vm568, %v404, %v416
        %v573 = vsel %vm569, %v406, %v418
        %v574 = vsel %vm570, %v493, %v505
        %v575 = vsel %vm571, %v495, %v507
        %v576 = vsel %vm568, %v410, %v422
        %v577 = vsel %vm569, %v412, %v424
        %v578 = vsel %vm570, %v499, %v511
        %v579 = vsel %vm571, %v501, %v513
        %v580 = vld [vmem:[%s2] sm:$0xff]
        %v581 = vld [vmem:[%s2 + $0x8] sm:$0xff]
        %583 = vset.pattern.permute.xlu0 0
        %584 = vperm.xlu0 %583, %v580
        %v585 = vpop.permute.xlu0 %584
        %588 = vset.pattern.permute.xlu0 0
        %589 = vperm.xlu0 %588, %v581
        %v590 = vpop.permute.xlu0 %589
        %v592 = vadd.f32 %v572, %v585
        %v593 = vadd.f32 %v573, %v585
        %v594 = vadd.f32 %v574, %v585
        %v595 = vadd.f32 %v575, %v585
        %v596 = vadd.f32 %v576, %v590
        %v597 = vadd.f32 %v577, %v590
        %v598 = vadd.f32 %v578, %v590
        %v599 = vadd.f32 %v579, %v590
        %v601 = vcombine.high %v592, %v592
        %v603 = vunpack.c.l.s4 1966171168
        %v604 = vunpack.c.0.s8 %v603
        %v605 = vlaneseq
        %v606 = vshrl.u32 %v605, 7
        %v607 = vsub.s32 %v604, %v606
        %v608 = vrot.slane %v592, %v607
        %v610 = vunpack.c.l.s4 1966171168
        %v611 = vunpack.c.0.s8 %v610
        %v612 = vlaneseq
        %v613 = vshrl.u32 %v612, 7
        %v614 = vsub.s32 %v611, %v613
        %v615 = vrot.slane %v601, %v614
        %v616 = vcombine.high %v608, %v608
        %v617 = vcombine.high %v615, %v615
        %v619 = vunpack.c.l.s4 1966171168
        %v620 = vunpack.c.0.s8 %v619
        %v621 = vlaneseq
        %v622 = vshrl.u32 %v621, 7
        %v623 = vsub.s32 %v620, %v622
        %v624 = vrot.slane %v608, %v623
        %v626 = vunpack.c.l.s4 1966171168
        %v627 = vunpack.c.0.s8 %v626
        %v628 = vlaneseq
        %v629 = vshrl.u32 %v628, 7
        %v630 = vsub.s32 %v627, %v629
        %v631 = vrot.slane %v615, %v630
        %v633 = vunpack.c.l.s4 1966171168
        %v634 = vunpack.c.0.s8 %v633
        %v635 = vlaneseq
        %v636 = vshrl.u32 %v635, 7
        %v637 = vsub.s32 %v634, %v636
        %v638 = vrot.slane %v616, %v637
        %v640 = vunpack.c.l.s4 1966171168
        %v641 = vunpack.c.0.s8 %v640
        %v642 = vlaneseq
        %v643 = vshrl.u32 %v642, 7
        %v644 = vsub.s32 %v641, %v643
        %v645 = vrot.slane %v617, %v644
        %v646 = vcombine.high %v624, %v624
        %v647 = vcombine.high %v631, %v631
        %v648 = vcombine.high %v638, %v638
        %v649 = vcombine.high %v645, %v645
        %s658 = scalar_lea.vmem %s259, 128 [#allocation5]
        %vm659 = vcmask 253952
        %660 = vst.msk [vmem:[%s658] sm:$0x1] %vm659, %v624
        %661 = vst.msk [vmem:[%s658 + $0x10] sm:$0x1] %vm659, %v638
        %662 = vst.msk [vmem:[%s658 + $0x20] sm:$0x1] %vm659, %v646
        %663 = vst.msk [vmem:[%s658 + $0x30] sm:$0x1] %vm659, %v648
        %664 = vst.msk [vmem:[%s658 + $0x40] sm:$0x1] %vm659, %v631
        %665 = vst.msk [vmem:[%s658 + $0x50] sm:$0x1] %vm659, %v645
        %666 = vst.msk [vmem:[%s658 + $0x60] sm:$0x1] %vm659, %v647
        %667 = vst.msk [vmem:[%s658 + $0x70] sm:$0x1] %vm659, %v649
        %v669 = vcombine.high %v596, %v596
        %v671 = vunpack.c.l.s4 1966171168
        %v672 = vunpack.c.0.s8 %v671
        %v673 = vlaneseq
        %v674 = vshrl.u32 %v673, 7
        %v675 = vsub.s32 %v672, %v674
        %v676 = vrot.slane %v596, %v675
        %v678 = vunpack.c.l.s4 1966171168
        %v679 = vunpack.c.0.s8 %v678
        %v680 = vlaneseq
        %v681 = vshrl.u32 %v680, 7
        %v682 = vsub.s32 %v679, %v681
        %v683 = vrot.slane %v669, %v682
        %v684 = vcombine.high %v676, %v676
        %v685 = vcombine.high %v683, %v683
        %v687 = vunpack.c.l.s4 1966171168
        %v688 = vunpack.c.0.s8 %v687
        %v689 = vlaneseq
        %v690 = vshrl.u32 %v689, 7
        %v691 = vsub.s32 %v688, %v690
        %v692 = vrot.slane %v676, %v691
        %v694 = vunpack.c.l.s4 1966171168
        %v695 = vunpack.c.0.s8 %v694
        %v696 = vlaneseq
        %v697 = vshrl.u32 %v696, 7
        %v698 = vsub.s32 %v695, %v697
        %v699 = vrot.slane %v683, %v698
        %v701 = vunpack.c.l.s4 1966171168
        %v702 = vunpack.c.0.s8 %v701
        %v703 = vlaneseq
        %v704 = vshrl.u32 %v703, 7
        %v705 = vsub.s32 %v702, %v704
        %v706 = vrot.slane %v684, %v705
        %v708 = vunpack.c.l.s4 1966171168
        %v709 = vunpack.c.0.s8 %v708
        %v710 = vlaneseq
        %v711 = vshrl.u32 %v710, 7
        %v712 = vsub.s32 %v709, %v711
        %v713 = vrot.slane %v685, %v712
        %v714 = vcombine.high %v692, %v692
        %v715 = vcombine.high %v699, %v699
        %v716 = vcombine.high %v706, %v706
        %v717 = vcombine.high %v713, %v713
        %v718 = vlaneseq
        %v719 = vshrl.u32 %v718, 7
        %v720 = vsub.s32 0, %v719
        %v721 = vrot.slane %v692, %v720
        %v722 = vlaneseq
        %v723 = vshrl.u32 %v722, 7
        %v724 = vsub.s32 0, %v723
        %v725 = vrot.slane %v706, %v724
        %v726 = vlaneseq
        %v727 = vshrl.u32 %v726, 7
        %v728 = vsub.s32 0, %v727
        %v729 = vrot.slane %v714, %v728
        %v730 = vlaneseq
        %v731 = vshrl.u32 %v730, 7
        %v732 = vsub.s32 0, %v731
        %v733 = vrot.slane %v716, %v732
        %v734 = vlaneseq
        %v735 = vshrl.u32 %v734, 7
        %v736 = vsub.s32 0, %v735
        %v737 = vrot.slane %v699, %v736
        %v738 = vlaneseq
        %v739 = vshrl.u32 %v738, 7
        %v740 = vsub.s32 0, %v739
        %v741 = vrot.slane %v713, %v740
        %v742 = vlaneseq
        %v743 = vshrl.u32 %v742, 7
        %v744 = vsub.s32 0, %v743
        %v745 = vrot.slane %v715, %v744
        %v746 = vlaneseq
        %v747 = vshrl.u32 %v746, 7
        %v748 = vsub.s32 0, %v747
        %v749 = vrot.slane %v717, %v748
        %750 = vrot.lane.b32.xlu0 %v721, 32
        %v751 = vpop.permute.xlu0 %750
        %752 = vrot.lane.b32.xlu0 %v725, 32
        %v753 = vpop.permute.xlu0 %752
        %754 = vrot.lane.b32.xlu0 %v729, 32
        %v755 = vpop.permute.xlu0 %754
        %756 = vrot.lane.b32.xlu0 %v733, 32
        %v757 = vpop.permute.xlu0 %756
        %758 = vrot.lane.b32.xlu0 %v737, 32
        %v759 = vpop.permute.xlu0 %758
        %760 = vrot.lane.b32.xlu0 %v741, 32
        %v761 = vpop.permute.xlu0 %760
        %762 = vrot.lane.b32.xlu0 %v745, 32
        %v763 = vpop.permute.xlu0 %762
        %764 = vrot.lane.b32.xlu0 %v749, 32
        %v765 = vpop.permute.xlu0 %764
        %vm774 = vcmask 516352
        %775 = vst.msk [vmem:[%s658] sm:$0x1] %vm774, %v751
        %776 = vst.msk [vmem:[%s658 + $0x10] sm:$0x1] %vm774, %v753
        %777 = vst.msk [vmem:[%s658 + $0x20] sm:$0x1] %vm774, %v755
        %778 = vst.msk [vmem:[%s658 + $0x30] sm:$0x1] %vm774, %v757
        %779 = vst.msk [vmem:[%s658 + $0x40] sm:$0x1] %vm774, %v759
        %780 = vst.msk [vmem:[%s658 + $0x50] sm:$0x1] %vm774, %v761
        %781 = vst.msk [vmem:[%s658 + $0x60] sm:$0x1] %vm774, %v763
        %782 = vst.msk [vmem:[%s658 + $0x70] sm:$0x1] %vm774, %v765
        %v783 = vlaneseq
        %v784 = vshrl.u32 %v783, 7
        %v785 = vsub.s32 0, %v784
        %v786 = vrot.slane %v624, %v785
        %v787 = vlaneseq
        %v788 = vshrl.u32 %v787, 7
        %v789 = vsub.s32 0, %v788
        %v790 = vrot.slane %v638, %v789
        %v791 = vlaneseq
        %v792 = vshrl.u32 %v791, 7
        %v793 = vsub.s32 0, %v792
        %v794 = vrot.slane %v646, %v793
        %v795 = vlaneseq
        %v796 = vshrl.u32 %v795, 7
        %v797 = vsub.s32 0, %v796
        %v798 = vrot.slane %v648, %v797
        %v799 = vlaneseq
        %v800 = vshrl.u32 %v799, 7
        %v801 = vsub.s32 0, %v800
        %v802 = vrot.slane %v631, %v801
        %v803 = vlaneseq
        %v804 = vshrl.u32 %v803, 7
        %v805 = vsub.s32 0, %v804
        %v806 = vrot.slane %v645, %v805
        %v807 = vlaneseq
        %v808 = vshrl.u32 %v807, 7
        %v809 = vsub.s32 0, %v808
        %v810 = vrot.slane %v647, %v809
        %v811 = vlaneseq
        %v812 = vshrl.u32 %v811, 7
        %v813 = vsub.s32 0, %v812
        %v814 = vrot.slane %v649, %v813
        %815 = vrot.lane.b32.xlu0 %v786, 96
        %v816 = vpop.permute.xlu0 %815
        %817 = vrot.lane.b32.xlu0 %v790, 96
        %v818 = vpop.permute.xlu0 %817
        %819 = vrot.lane.b32.xlu0 %v794, 96
        %v820 = vpop.permute.xlu0 %819
        %821 = vrot.lane.b32.xlu0 %v798, 96
        %v822 = vpop.permute.xlu0 %821
        %823 = vrot.lane.b32.xlu0 %v802, 96
        %v824 = vpop.permute.xlu0 %823
        %825 = vrot.lane.b32.xlu0 %v806, 96
        %v826 = vpop.permute.xlu0 %825
        %827 = vrot.lane.b32.xlu0 %v810, 96
        %v828 = vpop.permute.xlu0 %827
        %829 = vrot.lane.b32.xlu0 %v814, 96
        %v830 = vpop.permute.xlu0 %829
        %839 = vst.msk [vmem:[%s658 + $0x1] sm:$0x1] %vm659, %v816
        %840 = vst.msk [vmem:[%s658 + $0x11] sm:$0x1] %vm659, %v818
        %841 = vst.msk [vmem:[%s658 + $0x21] sm:$0x1] %vm659, %v820
        %842 = vst.msk [vmem:[%s658 + $0x31] sm:$0x1] %vm659, %v822
        %843 = vst.msk [vmem:[%s658 + $0x41] sm:$0x1] %vm659, %v824
        %844 = vst.msk [vmem:[%s658 + $0x51] sm:$0x1] %vm659, %v826
        %845 = vst.msk [vmem:[%s658 + $0x61] sm:$0x1] %vm659, %v828
        %846 = vst.msk [vmem:[%s658 + $0x71] sm:$0x1] %vm659, %v830
        %855 = vst.msk [vmem:[%s658 + $0x1] sm:$0x1] %vm774, %v692
        %856 = vst.msk [vmem:[%s658 + $0x11] sm:$0x1] %vm774, %v706
        %857 = vst.msk [vmem:[%s658 + $0x21] sm:$0x1] %vm774, %v714
        %858 = vst.msk [vmem:[%s658 + $0x31] sm:$0x1] %vm774, %v716
        %859 = vst.msk [vmem:[%s658 + $0x41] sm:$0x1] %vm774, %v699
        %860 = vst.msk [vmem:[%s658 + $0x51] sm:$0x1] %vm774, %v713
        %861 = vst.msk [vmem:[%s658 + $0x61] sm:$0x1] %vm774, %v715
        %862 = vst.msk [vmem:[%s658 + $0x71] sm:$0x1] %vm774, %v717
        %863 = vrot.lane.b32.xlu0 %v786, 64
        %v864 = vpop.permute.xlu0 %863
        %865 = vrot.lane.b32.xlu0 %v790, 64
        %v866 = vpop.permute.xlu0 %865
        %867 = vrot.lane.b32.xlu0 %v794, 64
        %v868 = vpop.permute.xlu0 %867
        %869 = vrot.lane.b32.xlu0 %v798, 64
        %v870 = vpop.permute.xlu0 %869
        %871 = vrot.lane.b32.xlu0 %v802, 64
        %v872 = vpop.permute.xlu0 %871
        %873 = vrot.lane.b32.xlu0 %v806, 64
        %v874 = vpop.permute.xlu0 %873
        %875 = vrot.lane.b32.xlu0 %v810, 64
        %v876 = vpop.permute.xlu0 %875
        %877 = vrot.lane.b32.xlu0 %v814, 64
        %v878 = vpop.permute.xlu0 %877
        %887 = vst.msk [vmem:[%s658 + $0x2] sm:$0x1] %vm659, %v864
        %888 = vst.msk [vmem:[%s658 + $0x12] sm:$0x1] %vm659, %v866
        %889 = vst.msk [vmem:[%s658 + $0x22] sm:$0x1] %vm659, %v868
        %890 = vst.msk [vmem:[%s658 + $0x32] sm:$0x1] %vm659, %v870
        %891 = vst.msk [vmem:[%s658 + $0x42] sm:$0x1] %vm659, %v872
        %892 = vst.msk [vmem:[%s658 + $0x52] sm:$0x1] %vm659, %v874
        %893 = vst.msk [vmem:[%s658 + $0x62] sm:$0x1] %vm659, %v876
        %894 = vst.msk [vmem:[%s658 + $0x72] sm:$0x1] %vm659, %v878
        %895 = vrot.lane.b32.xlu0 %v721, 96
        %v896 = vpop.permute.xlu0 %895
        %897 = vrot.lane.b32.xlu0 %v725, 96
        %v898 = vpop.permute.xlu0 %897
        %899 = vrot.lane.b32.xlu0 %v729, 96
        %v900 = vpop.permute.xlu0 %899
        %901 = vrot.lane.b32.xlu0 %v733, 96
        %v902 = vpop.permute.xlu0 %901
        %903 = vrot.lane.b32.xlu0 %v737, 96
        %v904 = vpop.permute.xlu0 %903
        %905 = vrot.lane.b32.xlu0 %v741, 96
        %v906 = vpop.permute.xlu0 %905
        %907 = vrot.lane.b32.xlu0 %v745, 96
        %v908 = vpop.permute.xlu0 %907
        %909 = vrot.lane.b32.xlu0 %v749, 96
        %v910 = vpop.permute.xlu0 %909
        %919 = vst.msk [vmem:[%s658 + $0x2] sm:$0x1] %vm774, %v896
        %920 = vst.msk [vmem:[%s658 + $0x12] sm:$0x1] %vm774, %v898
        %921 = vst.msk [vmem:[%s658 + $0x22] sm:$0x1] %vm774, %v900
        %922 = vst.msk [vmem:[%s658 + $0x32] sm:$0x1] %vm774, %v902
        %923 = vst.msk [vmem:[%s658 + $0x42] sm:$0x1] %vm774, %v904
        %924 = vst.msk [vmem:[%s658 + $0x52] sm:$0x1] %vm774, %v906
        %925 = vst.msk [vmem:[%s658 + $0x62] sm:$0x1] %vm774, %v908
        %926 = vst.msk [vmem:[%s658 + $0x72] sm:$0x1] %vm774, %v910
        %927 = vrot.lane.b32.xlu0 %v786, 32
        %v928 = vpop.permute.xlu0 %927
        %929 = vrot.lane.b32.xlu0 %v790, 32
        %v930 = vpop.permute.xlu0 %929
        %931 = vrot.lane.b32.xlu0 %v794, 32
        %v932 = vpop.permute.xlu0 %931
        %933 = vrot.lane.b32.xlu0 %v798, 32
        %v934 = vpop.permute.xlu0 %933
        %935 = vrot.lane.b32.xlu0 %v802, 32
        %v936 = vpop.permute.xlu0 %935
        %937 = vrot.lane.b32.xlu0 %v806, 32
        %v938 = vpop.permute.xlu0 %937
        %939 = vrot.lane.b32.xlu0 %v810, 32
        %v940 = vpop.permute.xlu0 %939
        %941 = vrot.lane.b32.xlu0 %v814, 32
        %v942 = vpop.permute.xlu0 %941
        %951 = vst.msk [vmem:[%s658 + $0x3] sm:$0x1] %vm659, %v928
        %952 = vst.msk [vmem:[%s658 + $0x13] sm:$0x1] %vm659, %v930
        %953 = vst.msk [vmem:[%s658 + $0x23] sm:$0x1] %vm659, %v932
        %954 = vst.msk [vmem:[%s658 + $0x33] sm:$0x1] %vm659, %v934
        %955 = vst.msk [vmem:[%s658 + $0x43] sm:$0x1] %vm659, %v936
        %956 = vst.msk [vmem:[%s658 + $0x53] sm:$0x1] %vm659, %v938
        %957 = vst.msk [vmem:[%s658 + $0x63] sm:$0x1] %vm659, %v940
        %958 = vst.msk [vmem:[%s658 + $0x73] sm:$0x1] %vm659, %v942
        %959 = vrot.lane.b32.xlu0 %v721, 64
        %v960 = vpop.permute.xlu0 %959
        %961 = vrot.lane.b32.xlu0 %v725, 64
        %v962 = vpop.permute.xlu0 %961
        %963 = vrot.lane.b32.xlu0 %v729, 64
        %v964 = vpop.permute.xlu0 %963
        %965 = vrot.lane.b32.xlu0 %v733, 64
        %v966 = vpop.permute.xlu0 %965
        %967 = vrot.lane.b32.xlu0 %v737, 64
        %v968 = vpop.permute.xlu0 %967
        %969 = vrot.lane.b32.xlu0 %v741, 64
        %v970 = vpop.permute.xlu0 %969
        %971 = vrot.lane.b32.xlu0 %v745, 64
        %v972 = vpop.permute.xlu0 %971
        %973 = vrot.lane.b32.xlu0 %v749, 64
        %v974 = vpop.permute.xlu0 %973
        %983 = vst.msk [vmem:[%s658 + $0x3] sm:$0x1] %vm774, %v960
        %984 = vst.msk [vmem:[%s658 + $0x13] sm:$0x1] %vm774, %v962
        %985 = vst.msk [vmem:[%s658 + $0x23] sm:$0x1] %vm774, %v964
        %986 = vst.msk [vmem:[%s658 + $0x33] sm:$0x1] %vm774, %v966
        %987 = vst.msk [vmem:[%s658 + $0x43] sm:$0x1] %vm774, %v968
        %988 = vst.msk [vmem:[%s658 + $0x53] sm:$0x1] %vm774, %v970
        %989 = vst.msk [vmem:[%s658 + $0x63] sm:$0x1] %vm774, %v972
        %990 = vst.msk [vmem:[%s658 + $0x73] sm:$0x1] %vm774, %v974
        %v992 = vcombine.high %v593, %v593
        %v994 = vunpack.c.l.s4 1966171168
        %v995 = vunpack.c.0.s8 %v994
        %v996 = vlaneseq
        %v997 = vshrl.u32 %v996, 7
        %v998 = vsub.s32 %v995, %v997
        %v999 = vrot.slane %v593, %v998
        %v1001 = vunpack.c.l.s4 1966171168
        %v1002 = vunpack.c.0.s8 %v1001
        %v1003 = vlaneseq
        %v1004 = vshrl.u32 %v1003, 7
        %v1005 = vsub.s32 %v1002, %v1004
        %v1006 = vrot.slane %v992, %v1005
        %v1007 = vcombine.high %v999, %v999
        %v1008 = vcombine.high %v1006, %v1006
        %v1010 = vunpack.c.l.s4 1966171168
        %v1011 = vunpack.c.0.s8 %v1010
        %v1012 = vlaneseq
        %v1013 = vshrl.u32 %v1012, 7
        %v1014 = vsub.s32 %v1011, %v1013
        %v1015 = vrot.slane %v999, %v1014
        %v1017 = vunpack.c.l.s4 1966171168
        %v1018 = vunpack.c.0.s8 %v1017
        %v1019 = vlaneseq
        %v1020 = vshrl.u32 %v1019, 7
        %v1021 = vsub.s32 %v1018, %v1020
        %v1022 = vrot.slane %v1006, %v1021
        %v1024 = vunpack.c.l.s4 1966171168
        %v1025 = vunpack.c.0.s8 %v1024
        %v1026 = vlaneseq
        %v1027 = vshrl.u32 %v1026, 7
        %v1028 = vsub.s32 %v1025, %v1027
        %v1029 = vrot.slane %v1007, %v1028
        %v1031 = vunpack.c.l.s4 1966171168
        %v1032 = vunpack.c.0.s8 %v1031
        %v1033 = vlaneseq
        %v1034 = vshrl.u32 %v1033, 7
        %v1035 = vsub.s32 %v1032, %v1034
        %v1036 = vrot.slane %v1008, %v1035
        %v1037 = vcombine.high %v1015, %v1015
        %v1038 = vcombine.high %v1022, %v1022
        %v1039 = vcombine.high %v1029, %v1029
        %v1040 = vcombine.high %v1036, %v1036
        %1049 = vst.msk [vmem:[%s658 + $0x4] sm:$0x1] %vm659, %v1015
        %1050 = vst.msk [vmem:[%s658 + $0x14] sm:$0x1] %vm659, %v1029
        %1051 = vst.msk [vmem:[%s658 + $0x24] sm:$0x1] %vm659, %v1037
        %1052 = vst.msk [vmem:[%s658 + $0x34] sm:$0x1] %vm659, %v1039
        %1053 = vst.msk [vmem:[%s658 + $0x44] sm:$0x1] %vm659, %v1022
        %1054 = vst.msk [vmem:[%s658 + $0x54] sm:$0x1] %vm659, %v1036
        %1055 = vst.msk [vmem:[%s658 + $0x64] sm:$0x1] %vm659, %v1038
        %1056 = vst.msk [vmem:[%s658 + $0x74] sm:$0x1] %vm659, %v1040
        %v1058 = vcombine.high %v597, %v597
        %v1060 = vunpack.c.l.s4 1966171168
        %v1061 = vunpack.c.0.s8 %v1060
        %v1062 = vlaneseq
        %v1063 = vshrl.u32 %v1062, 7
        %v1064 = vsub.s32 %v1061, %v1063
        %v1065 = vrot.slane %v597, %v1064
        %v1067 = vunpack.c.l.s4 1966171168
        %v1068 = vunpack.c.0.s8 %v1067
        %v1069 = vlaneseq
        %v1070 = vshrl.u32 %v1069, 7
        %v1071 = vsub.s32 %v1068, %v1070
        %v1072 = vrot.slane %v1058, %v1071
        %v1073 = vcombine.high %v1065, %v1065
        %v1074 = vcombine.high %v1072, %v1072
        %v1076 = vunpack.c.l.s4 1966171168
        %v1077 = vunpack.c.0.s8 %v1076
        %v1078 = vlaneseq
        %v1079 = vshrl.u32 %v1078, 7
        %v1080 = vsub.s32 %v1077, %v1079
        %v1081 = vrot.slane %v1065, %v1080
        %v1083 = vunpack.c.l.s4 1966171168
        %v1084 = vunpack.c.0.s8 %v1083
        %v1085 = vlaneseq
        %v1086 = vshrl.u32 %v1085, 7
        %v1087 = vsub.s32 %v1084, %v1086
        %v1088 = vrot.slane %v1072, %v1087
        %v1090 = vunpack.c.l.s4 1966171168
        %v1091 = vunpack.c.0.s8 %v1090
        %v1092 = vlaneseq
        %v1093 = vshrl.u32 %v1092, 7
        %v1094 = vsub.s32 %v1091, %v1093
        %v1095 = vrot.slane %v1073, %v1094
        %v1097 = vunpack.c.l.s4 1966171168
        %v1098 = vunpack.c.0.s8 %v1097
        %v1099 = vlaneseq
        %v1100 = vshrl.u32 %v1099, 7
        %v1101 = vsub.s32 %v1098, %v1100
        %v1102 = vrot.slane %v1074, %v1101
        %v1103 = vcombine.high %v1081, %v1081
        %v1104 = vcombine.high %v1088, %v1088
        %v1105 = vcombine.high %v1095, %v1095
        %v1106 = vcombine.high %v1102, %v1102
        %v1107 = vlaneseq
        %v1108 = vshrl.u32 %v1107, 7
        %v1109 = vsub.s32 0, %v1108
        %v1110 = vrot.slane %v1081, %v1109
        %v1111 = vlaneseq
        %v1112 = vshrl.u32 %v1111, 7
        %v1113 = vsub.s32 0, %v1112
        %v1114 = vrot.slane %v1095, %v1113
        %v1115 = vlaneseq
        %v1116 = vshrl.u32 %v1115, 7
        %v1117 = vsub.s32 0, %v1116
        %v1118 = vrot.slane %v1103, %v1117
        %v1119 = vlaneseq
        %v1120 = vshrl.u32 %v1119, 7
        %v1121 = vsub.s32 0, %v1120
        %v1122 = vrot.slane %v1105, %v1121
        %v1123 = vlaneseq
        %v1124 = vshrl.u32 %v1123, 7
        %v1125 = vsub.s32 0, %v1124
        %v1126 = vrot.slane %v1088, %v1125
        %v1127 = vlaneseq
        %v1128 = vshrl.u32 %v1127, 7
        %v1129 = vsub.s32 0, %v1128
        %v1130 = vrot.slane %v1102, %v1129
        %v1131 = vlaneseq
        %v1132 = vshrl.u32 %v1131, 7
        %v1133 = vsub.s32 0, %v1132
        %v1134 = vrot.slane %v1104, %v1133
        %v1135 = vlaneseq
        %v1136 = vshrl.u32 %v1135, 7
        %v1137 = vsub.s32 0, %v1136
        %v1138 = vrot.slane %v1106, %v1137
        %1139 = vrot.lane.b32.xlu0 %v1110, 32
        %v1140 = vpop.permute.xlu0 %1139
        %1141 = vrot.lane.b32.xlu0 %v1114, 32
        %v1142 = vpop.permute.xlu0 %1141
        %1143 = vrot.lane.b32.xlu0 %v1118, 32
        %v1144 = vpop.permute.xlu0 %1143
        %1145 = vrot.lane.b32.xlu0 %v1122, 32
        %v1146 = vpop.permute.xlu0 %1145
        %1147 = vrot.lane.b32.xlu0 %v1126, 32
        %v1148 = vpop.permute.xlu0 %1147
        %1149 = vrot.lane.b32.xlu0 %v1130, 32
        %v1150 = vpop.permute.xlu0 %1149
        %1151 = vrot.lane.b32.xlu0 %v1134, 32
        %v1152 = vpop.permute.xlu0 %1151
        %1153 = vrot.lane.b32.xlu0 %v1138, 32
        %v1154 = vpop.permute.xlu0 %1153
        %1163 = vst.msk [vmem:[%s658 + $0x4] sm:$0x1] %vm774, %v1140
        %1164 = vst.msk [vmem:[%s658 + $0x14] sm:$0x1] %vm774, %v1142
        %1165 = vst.msk [vmem:[%s658 + $0x24] sm:$0x1] %vm774, %v1144
        %1166 = vst.msk [vmem:[%s658 + $0x34] sm:$0x1] %vm774, %v1146
        %1167 = vst.msk [vmem:[%s658 + $0x44] sm:$0x1] %vm774, %v1148
        %1168 = vst.msk [vmem:[%s658 + $0x54] sm:$0x1] %vm774, %v1150
        %1169 = vst.msk [vmem:[%s658 + $0x64] sm:$0x1] %vm774, %v1152
        %1170 = vst.msk [vmem:[%s658 + $0x74] sm:$0x1] %vm774, %v1154
        %v1171 = vlaneseq
        %v1172 = vshrl.u32 %v1171, 7
        %v1173 = vsub.s32 0, %v1172
        %v1174 = vrot.slane %v1015, %v1173
        %v1175 = vlaneseq
        %v1176 = vshrl.u32 %v1175, 7
        %v1177 = vsub.s32 0, %v1176
        %v1178 = vrot.slane %v1029, %v1177
        %v1179 = vlaneseq
        %v1180 = vshrl.u32 %v1179, 7
        %v1181 = vsub.s32 0, %v1180
        %v1182 = vrot.slane %v1037, %v1181
        %v1183 = vlaneseq
        %v1184 = vshrl.u32 %v1183, 7
        %v1185 = vsub.s32 0, %v1184
        %v1186 = vrot.slane %v1039, %v1185
        %v1187 = vlaneseq
        %v1188 = vshrl.u32 %v1187, 7
        %v1189 = vsub.s32 0, %v1188
        %v1190 = vrot.slane %v1022, %v1189
        %v1191 = vlaneseq
        %v1192 = vshrl.u32 %v1191, 7
        %v1193 = vsub.s32 0, %v1192
        %v1194 = vrot.slane %v1036, %v1193
        %v1195 = vlaneseq
        %v1196 = vshrl.u32 %v1195, 7
        %v1197 = vsub.s32 0, %v1196
        %v1198 = vrot.slane %v1038, %v1197
        %v1199 = vlaneseq
        %v1200 = vshrl.u32 %v1199, 7
        %v1201 = vsub.s32 0, %v1200
        %v1202 = vrot.slane %v1040, %v1201
        %1203 = vrot.lane.b32.xlu0 %v1174, 96
        %v1204 = vpop.permute.xlu0 %1203
        %1205 = vrot.lane.b32.xlu0 %v1178, 96
        %v1206 = vpop.permute.xlu0 %1205
        %1207 = vrot.lane.b32.xlu0 %v1182, 96
        %v1208 = vpop.permute.xlu0 %1207
        %1209 = vrot.lane.b32.xlu0 %v1186, 96
        %v1210 = vpop.permute.xlu0 %1209
        %1211 = vrot.lane.b32.xlu0 %v1190, 96
        %v1212 = vpop.permute.xlu0 %1211
        %1213 = vrot.lane.b32.xlu0 %v1194, 96
        %v1214 = vpop.permute.xlu0 %1213
        %1215 = vrot.lane.b32.xlu0 %v1198, 96
        %v1216 = vpop.permute.xlu0 %1215
        %1217 = vrot.lane.b32.xlu0 %v1202, 96
        %v1218 = vpop.permute.xlu0 %1217
        %1227 = vst.msk [vmem:[%s658 + $0x5] sm:$0x1] %vm659, %v1204
        %1228 = vst.msk [vmem:[%s658 + $0x15] sm:$0x1] %vm659, %v1206
        %1229 = vst.msk [vmem:[%s658 + $0x25] sm:$0x1] %vm659, %v1208
        %1230 = vst.msk [vmem:[%s658 + $0x35] sm:$0x1] %vm659, %v1210
        %1231 = vst.msk [vmem:[%s658 + $0x45] sm:$0x1] %vm659, %v1212
        %1232 = vst.msk [vmem:[%s658 + $0x55] sm:$0x1] %vm659, %v1214
        %1233 = vst.msk [vmem:[%s658 + $0x65] sm:$0x1] %vm659, %v1216
        %1234 = vst.msk [vmem:[%s658 + $0x75] sm:$0x1] %vm659, %v1218
        %1243 = vst.msk [vmem:[%s658 + $0x5] sm:$0x1] %vm774, %v1081
        %1244 = vst.msk [vmem:[%s658 + $0x15] sm:$0x1] %vm774, %v1095
        %1245 = vst.msk [vmem:[%s658 + $0x25] sm:$0x1] %vm774, %v1103
        %1246 = vst.msk [vmem:[%s658 + $0x35] sm:$0x1] %vm774, %v1105
        %1247 = vst.msk [vmem:[%s658 + $0x45] sm:$0x1] %vm774, %v1088
        %1248 = vst.msk [vmem:[%s658 + $0x55] sm:$0x1] %vm774, %v1102
        %1249 = vst.msk [vmem:[%s658 + $0x65] sm:$0x1] %vm774, %v1104
        %1250 = vst.msk [vmem:[%s658 + $0x75] sm:$0x1] %vm774, %v1106
        %1251 = vrot.lane.b32.xlu0 %v1174, 64
        %v1252 = vpop.permute.xlu0 %1251
        %1253 = vrot.lane.b32.xlu0 %v1178, 64
        %v1254 = vpop.permute.xlu0 %1253
        %1255 = vrot.lane.b32.xlu0 %v1182, 64
        %v1256 = vpop.permute.xlu0 %1255
        %1257 = vrot.lane.b32.xlu0 %v1186, 64
        %v1258 = vpop.permute.xlu0 %1257
        %1259 = vrot.lane.b32.xlu0 %v1190, 64
        %v1260 = vpop.permute.xlu0 %1259
        %1261 = vrot.lane.b32.xlu0 %v1194, 64
        %v1262 = vpop.permute.xlu0 %1261
        %1263 = vrot.lane.b32.xlu0 %v1198, 64
        %v1264 = vpop.permute.xlu0 %1263
        %1265 = vrot.lane.b32.xlu0 %v1202, 64
        %v1266 = vpop.permute.xlu0 %1265
        %1275 = vst.msk [vmem:[%s658 + $0x6] sm:$0x1] %vm659, %v1252
        %1276 = vst.msk [vmem:[%s658 + $0x16] sm:$0x1] %vm659, %v1254
        %1277 = vst.msk [vmem:[%s658 + $0x26] sm:$0x1] %vm659, %v1256
        %1278 = vst.msk [vmem:[%s658 + $0x36] sm:$0x1] %vm659, %v1258
        %1279 = vst.msk [vmem:[%s658 + $0x46] sm:$0x1] %vm659, %v1260
        %1280 = vst.msk [vmem:[%s658 + $0x56] sm:$0x1] %vm659, %v1262
        %1281 = vst.msk [vmem:[%s658 + $0x66] sm:$0x1] %vm659, %v1264
        %1282 = vst.msk [vmem:[%s658 + $0x76] sm:$0x1] %vm659, %v1266
        %1283 = vrot.lane.b32.xlu0 %v1110, 96
        %v1284 = vpop.permute.xlu0 %1283
        %1285 = vrot.lane.b32.xlu0 %v1114, 96
        %v1286 = vpop.permute.xlu0 %1285
        %1287 = vrot.lane.b32.xlu0 %v1118, 96
        %v1288 = vpop.permute.xlu0 %1287
        %1289 = vrot.lane.b32.xlu0 %v1122, 96
        %v1290 = vpop.permute.xlu0 %1289
        %1291 = vrot.lane.b32.xlu0 %v1126, 96
        %v1292 = vpop.permute.xlu0 %1291
        %1293 = vrot.lane.b32.xlu0 %v1130, 96
        %v1294 = vpop.permute.xlu0 %1293
        %1295 = vrot.lane.b32.xlu0 %v1134, 96
        %v1296 = vpop.permute.xlu0 %1295
        %1297 = vrot.lane.b32.xlu0 %v1138, 96
        %v1298 = vpop.permute.xlu0 %1297
        %1307 = vst.msk [vmem:[%s658 + $0x6] sm:$0x1] %vm774, %v1284
        %1308 = vst.msk [vmem:[%s658 + $0x16] sm:$0x1] %vm774, %v1286
        %1309 = vst.msk [vmem:[%s658 + $0x26] sm:$0x1] %vm774, %v1288
        %1310 = vst.msk [vmem:[%s658 + $0x36] sm:$0x1] %vm774, %v1290
        %1311 = vst.msk [vmem:[%s658 + $0x46] sm:$0x1] %vm774, %v1292
        %1312 = vst.msk [vmem:[%s658 + $0x56] sm:$0x1] %vm774, %v1294
        %1313 = vst.msk [vmem:[%s658 + $0x66] sm:$0x1] %vm774, %v1296
        %1314 = vst.msk [vmem:[%s658 + $0x76] sm:$0x1] %vm774, %v1298
        %1315 = vrot.lane.b32.xlu0 %v1174, 32
        %v1316 = vpop.permute.xlu0 %1315
        %1317 = vrot.lane.b32.xlu0 %v1178, 32
        %v1318 = vpop.permute.xlu0 %1317
        %1319 = vrot.lane.b32.xlu0 %v1182, 32
        %v1320 = vpop.permute.xlu0 %1319
        %1321 = vrot.lane.b32.xlu0 %v1186, 32
        %v1322 = vpop.permute.xlu0 %1321
        %1323 = vrot.lane.b32.xlu0 %v1190, 32
        %v1324 = vpop.permute.xlu0 %1323
        %1325 = vrot.lane.b32.xlu0 %v1194, 32
        %v1326 = vpop.permute.xlu0 %1325
        %1327 = vrot.lane.b32.xlu0 %v1198, 32
        %v1328 = vpop.permute.xlu0 %1327
        %1329 = vrot.lane.b32.xlu0 %v1202, 32
        %v1330 = vpop.permute.xlu0 %1329
        %1339 = vst.msk [vmem:[%s658 + $0x7] sm:$0x1] %vm659, %v1316
        %1340 = vst.msk [vmem:[%s658 + $0x17] sm:$0x1] %vm659, %v1318
        %1341 = vst.msk [vmem:[%s658 + $0x27] sm:$0x1] %vm659, %v1320
        %1342 = vst.msk [vmem:[%s658 + $0x37] sm:$0x1] %vm659, %v1322
        %1343 = vst.msk [vmem:[%s658 + $0x47] sm:$0x1] %vm659, %v1324
        %1344 = vst.msk [vmem:[%s658 + $0x57] sm:$0x1] %vm659, %v1326
        %1345 = vst.msk [vmem:[%s658 + $0x67] sm:$0x1] %vm659, %v1328
        %1346 = vst.msk [vmem:[%s658 + $0x77] sm:$0x1] %vm659, %v1330
        %1347 = vrot.lane.b32.xlu0 %v1110, 64
        %v1348 = vpop.permute.xlu0 %1347
        %1349 = vrot.lane.b32.xlu0 %v1114, 64
        %v1350 = vpop.permute.xlu0 %1349
        %1351 = vrot.lane.b32.xlu0 %v1118, 64
        %v1352 = vpop.permute.xlu0 %1351
        %1353 = vrot.lane.b32.xlu0 %v1122, 64
        %v1354 = vpop.permute.xlu0 %1353
        %1355 = vrot.lane.b32.xlu0 %v1126, 64
        %v1356 = vpop.permute.xlu0 %1355
        %1357 = vrot.lane.b32.xlu0 %v1130, 64
        %v1358 = vpop.permute.xlu0 %1357
        %1359 = vrot.lane.b32.xlu0 %v1134, 64
        %v1360 = vpop.permute.xlu0 %1359
        %1361 = vrot.lane.b32.xlu0 %v1138, 64
        %v1362 = vpop.permute.xlu0 %1361
        %1371 = vst.msk [vmem:[%s658 + $0x7] sm:$0x1] %vm774, %v1348
        %1372 = vst.msk [vmem:[%s658 + $0x17] sm:$0x1] %vm774, %v1350
        %1373 = vst.msk [vmem:[%s658 + $0x27] sm:$0x1] %vm774, %v1352
        %1374 = vst.msk [vmem:[%s658 + $0x37] sm:$0x1] %vm774, %v1354
        %1375 = vst.msk [vmem:[%s658 + $0x47] sm:$0x1] %vm774, %v1356
        %1376 = vst.msk [vmem:[%s658 + $0x57] sm:$0x1] %vm774, %v1358
        %1377 = vst.msk [vmem:[%s658 + $0x67] sm:$0x1] %vm774, %v1360
        %1378 = vst.msk [vmem:[%s658 + $0x77] sm:$0x1] %vm774, %v1362
        %v1380 = vcombine.high %v594, %v594
        %v1382 = vunpack.c.l.s4 1966171168
        %v1383 = vunpack.c.0.s8 %v1382
        %v1384 = vlaneseq
        %v1385 = vshrl.u32 %v1384, 7
        %v1386 = vsub.s32 %v1383, %v1385
        %v1387 = vrot.slane %v594, %v1386
        %v1389 = vunpack.c.l.s4 1966171168
        %v1390 = vunpack.c.0.s8 %v1389
        %v1391 = vlaneseq
        %v1392 = vshrl.u32 %v1391, 7
        %v1393 = vsub.s32 %v1390, %v1392
        %v1394 = vrot.slane %v1380, %v1393
        %v1395 = vcombine.high %v1387, %v1387
        %v1396 = vcombine.high %v1394, %v1394
        %v1398 = vunpack.c.l.s4 1966171168
        %v1399 = vunpack.c.0.s8 %v1398
        %v1400 = vlaneseq
        %v1401 = vshrl.u32 %v1400, 7
        %v1402 = vsub.s32 %v1399, %v1401
        %v1403 = vrot.slane %v1387, %v1402
        %v1405 = vunpack.c.l.s4 1966171168
        %v1406 = vunpack.c.0.s8 %v1405
        %v1407 = vlaneseq
        %v1408 = vshrl.u32 %v1407, 7
        %v1409 = vsub.s32 %v1406, %v1408
        %v1410 = vrot.slane %v1394, %v1409
        %v1412 = vunpack.c.l.s4 1966171168
        %v1413 = vunpack.c.0.s8 %v1412
        %v1414 = vlaneseq
        %v1415 = vshrl.u32 %v1414, 7
        %v1416 = vsub.s32 %v1413, %v1415
        %v1417 = vrot.slane %v1395, %v1416
        %v1419 = vunpack.c.l.s4 1966171168
        %v1420 = vunpack.c.0.s8 %v1419
        %v1421 = vlaneseq
        %v1422 = vshrl.u32 %v1421, 7
        %v1423 = vsub.s32 %v1420, %v1422
        %v1424 = vrot.slane %v1396, %v1423
        %v1425 = vcombine.high %v1403, %v1403
        %v1426 = vcombine.high %v1410, %v1410
        %v1427 = vcombine.high %v1417, %v1417
        %v1428 = vcombine.high %v1424, %v1424
        %1437 = vst.msk [vmem:[%s658 + $0x8] sm:$0x1] %vm659, %v1403
        %1438 = vst.msk [vmem:[%s658 + $0x18] sm:$0x1] %vm659, %v1417
        %1439 = vst.msk [vmem:[%s658 + $0x28] sm:$0x1] %vm659, %v1425
        %1440 = vst.msk [vmem:[%s658 + $0x38] sm:$0x1] %vm659, %v1427
        %1441 = vst.msk [vmem:[%s658 + $0x48] sm:$0x1] %vm659, %v1410
        %1442 = vst.msk [vmem:[%s658 + $0x58] sm:$0x1] %vm659, %v1424
        %1443 = vst.msk [vmem:[%s658 + $0x68] sm:$0x1] %vm659, %v1426
        %1444 = vst.msk [vmem:[%s658 + $0x78] sm:$0x1] %vm659, %v1428
        %v1446 = vcombine.high %v598, %v598
        %v1448 = vunpack.c.l.s4 1966171168
        %v1449 = vunpack.c.0.s8 %v1448
        %v1450 = vlaneseq
        %v1451 = vshrl.u32 %v1450, 7
        %v1452 = vsub.s32 %v1449, %v1451
        %v1453 = vrot.slane %v598, %v1452
        %v1455 = vunpack.c.l.s4 1966171168
        %v1456 = vunpack.c.0.s8 %v1455
        %v1457 = vlaneseq
        %v1458 = vshrl.u32 %v1457, 7
        %v1459 = vsub.s32 %v1456, %v1458
        %v1460 = vrot.slane %v1446, %v1459
        %v1461 = vcombine.high %v1453, %v1453
        %v1462 = vcombine.high %v1460, %v1460
        %v1464 = vunpack.c.l.s4 1966171168
        %v1465 = vunpack.c.0.s8 %v1464
        %v1466 = vlaneseq
        %v1467 = vshrl.u32 %v1466, 7
        %v1468 = vsub.s32 %v1465, %v1467
        %v1469 = vrot.slane %v1453, %v1468
        %v1471 = vunpack.c.l.s4 1966171168
        %v1472 = vunpack.c.0.s8 %v1471
        %v1473 = vlaneseq
        %v1474 = vshrl.u32 %v1473, 7
        %v1475 = vsub.s32 %v1472, %v1474
        %v1476 = vrot.slane %v1460, %v1475
        %v1478 = vunpack.c.l.s4 1966171168
        %v1479 = vunpack.c.0.s8 %v1478
        %v1480 = vlaneseq
        %v1481 = vshrl.u32 %v1480, 7
        %v1482 = vsub.s32 %v1479, %v1481
        %v1483 = vrot.slane %v1461, %v1482
        %v1485 = vunpack.c.l.s4 1966171168
        %v1486 = vunpack.c.0.s8 %v1485
        %v1487 = vlaneseq
        %v1488 = vshrl.u32 %v1487, 7
        %v1489 = vsub.s32 %v1486, %v1488
        %v1490 = vrot.slane %v1462, %v1489
        %v1491 = vcombine.high %v1469, %v1469
        %v1492 = vcombine.high %v1476, %v1476
        %v1493 = vcombine.high %v1483, %v1483
        %v1494 = vcombine.high %v1490, %v1490
        %v1495 = vlaneseq
        %v1496 = vshrl.u32 %v1495, 7
        %v1497 = vsub.s32 0, %v1496
        %v1498 = vrot.slane %v1469, %v1497
        %v1499 = vlaneseq
        %v1500 = vshrl.u32 %v1499, 7
        %v1501 = vsub.s32 0, %v1500
        %v1502 = vrot.slane %v1483, %v1501
        %v1503 = vlaneseq
        %v1504 = vshrl.u32 %v1503, 7
        %v1505 = vsub.s32 0, %v1504
        %v1506 = vrot.slane %v1491, %v1505
        %v1507 = vlaneseq
        %v1508 = vshrl.u32 %v1507, 7
        %v1509 = vsub.s32 0, %v1508
        %v1510 = vrot.slane %v1493, %v1509
        %v1511 = vlaneseq
        %v1512 = vshrl.u32 %v1511, 7
        %v1513 = vsub.s32 0, %v1512
        %v1514 = vrot.slane %v1476, %v1513
        %v1515 = vlaneseq
        %v1516 = vshrl.u32 %v1515, 7
        %v1517 = vsub.s32 0, %v1516
        %v1518 = vrot.slane %v1490, %v1517
        %v1519 = vlaneseq
        %v1520 = vshrl.u32 %v1519, 7
        %v1521 = vsub.s32 0, %v1520
        %v1522 = vrot.slane %v1492, %v1521
        %v1523 = vlaneseq
        %v1524 = vshrl.u32 %v1523, 7
        %v1525 = vsub.s32 0, %v1524
        %v1526 = vrot.slane %v1494, %v1525
        %1527 = vrot.lane.b32.xlu0 %v1498, 32
        %v1528 = vpop.permute.xlu0 %1527
        %1529 = vrot.lane.b32.xlu0 %v1502, 32
        %v1530 = vpop.permute.xlu0 %1529
        %1531 = vrot.lane.b32.xlu0 %v1506, 32
        %v1532 = vpop.permute.xlu0 %1531
        %1533 = vrot.lane.b32.xlu0 %v1510, 32
        %v1534 = vpop.permute.xlu0 %1533
        %1535 = vrot.lane.b32.xlu0 %v1514, 32
        %v1536 = vpop.permute.xlu0 %1535
        %1537 = vrot.lane.b32.xlu0 %v1518, 32
        %v1538 = vpop.permute.xlu0 %1537
        %1539 = vrot.lane.b32.xlu0 %v1522, 32
        %v1540 = vpop.permute.xlu0 %1539
        %1541 = vrot.lane.b32.xlu0 %v1526, 32
        %v1542 = vpop.permute.xlu0 %1541
        %1551 = vst.msk [vmem:[%s658 + $0x8] sm:$0x1] %vm774, %v1528
        %1552 = vst.msk [vmem:[%s658 + $0x18] sm:$0x1] %vm774, %v1530
        %1553 = vst.msk [vmem:[%s658 + $0x28] sm:$0x1] %vm774, %v1532
        %1554 = vst.msk [vmem:[%s658 + $0x38] sm:$0x1] %vm774, %v1534
        %1555 = vst.msk [vmem:[%s658 + $0x48] sm:$0x1] %vm774, %v1536
        %1556 = vst.msk [vmem:[%s658 + $0x58] sm:$0x1] %vm774, %v1538
        %1557 = vst.msk [vmem:[%s658 + $0x68] sm:$0x1] %vm774, %v1540
        %1558 = vst.msk [vmem:[%s658 + $0x78] sm:$0x1] %vm774, %v1542
        %v1559 = vlaneseq
        %v1560 = vshrl.u32 %v1559, 7
        %v1561 = vsub.s32 0, %v1560
        %v1562 = vrot.slane %v1403, %v1561
        %v1563 = vlaneseq
        %v1564 = vshrl.u32 %v1563, 7
        %v1565 = vsub.s32 0, %v1564
        %v1566 = vrot.slane %v1417, %v1565
        %v1567 = vlaneseq
        %v1568 = vshrl.u32 %v1567, 7
        %v1569 = vsub.s32 0, %v1568
        %v1570 = vrot.slane %v1425, %v1569
        %v1571 = vlaneseq
        %v1572 = vshrl.u32 %v1571, 7
        %v1573 = vsub.s32 0, %v1572
        %v1574 = vrot.slane %v1427, %v1573
        %v1575 = vlaneseq
        %v1576 = vshrl.u32 %v1575, 7
        %v1577 = vsub.s32 0, %v1576
        %v1578 = vrot.slane %v1410, %v1577
        %v1579 = vlaneseq
        %v1580 = vshrl.u32 %v1579, 7
        %v1581 = vsub.s32 0, %v1580
        %v1582 = vrot.slane %v1424, %v1581
        %v1583 = vlaneseq
        %v1584 = vshrl.u32 %v1583, 7
        %v1585 = vsub.s32 0, %v1584
        %v1586 = vrot.slane %v1426, %v1585
        %v1587 = vlaneseq
        %v1588 = vshrl.u32 %v1587, 7
        %v1589 = vsub.s32 0, %v1588
        %v1590 = vrot.slane %v1428, %v1589
        %1591 = vrot.lane.b32.xlu0 %v1562, 96
        %v1592 = vpop.permute.xlu0 %1591
        %1593 = vrot.lane.b32.xlu0 %v1566, 96
        %v1594 = vpop.permute.xlu0 %1593
        %1595 = vrot.lane.b32.xlu0 %v1570, 96
        %v1596 = vpop.permute.xlu0 %1595
        %1597 = vrot.lane.b32.xlu0 %v1574, 96
        %v1598 = vpop.permute.xlu0 %1597
        %1599 = vrot.lane.b32.xlu0 %v1578, 96
        %v1600 = vpop.permute.xlu0 %1599
        %1601 = vrot.lane.b32.xlu0 %v1582, 96
        %v1602 = vpop.permute.xlu0 %1601
        %1603 = vrot.lane.b32.xlu0 %v1586, 96
        %v1604 = vpop.permute.xlu0 %1603
        %1605 = vrot.lane.b32.xlu0 %v1590, 96
        %v1606 = vpop.permute.xlu0 %1605
        %1615 = vst.msk [vmem:[%s658 + $0x9] sm:$0x1] %vm659, %v1592
        %1616 = vst.msk [vmem:[%s658 + $0x19] sm:$0x1] %vm659, %v1594
        %1617 = vst.msk [vmem:[%s658 + $0x29] sm:$0x1] %vm659, %v1596
        %1618 = vst.msk [vmem:[%s658 + $0x39] sm:$0x1] %vm659, %v1598
        %1619 = vst.msk [vmem:[%s658 + $0x49] sm:$0x1] %vm659, %v1600
        %1620 = vst.msk [vmem:[%s658 + $0x59] sm:$0x1] %vm659, %v1602
        %1621 = vst.msk [vmem:[%s658 + $0x69] sm:$0x1] %vm659, %v1604
        %1622 = vst.msk [vmem:[%s658 + $0x79] sm:$0x1] %vm659, %v1606
        %1631 = vst.msk [vmem:[%s658 + $0x9] sm:$0x1] %vm774, %v1469
        %1632 = vst.msk [vmem:[%s658 + $0x19] sm:$0x1] %vm774, %v1483
        %1633 = vst.msk [vmem:[%s658 + $0x29] sm:$0x1] %vm774, %v1491
        %1634 = vst.msk [vmem:[%s658 + $0x39] sm:$0x1] %vm774, %v1493
        %1635 = vst.msk [vmem:[%s658 + $0x49] sm:$0x1] %vm774, %v1476
        %1636 = vst.msk [vmem:[%s658 + $0x59] sm:$0x1] %vm774, %v1490
        %1637 = vst.msk [vmem:[%s658 + $0x69] sm:$0x1] %vm774, %v1492
        %1638 = vst.msk [vmem:[%s658 + $0x79] sm:$0x1] %vm774, %v1494
        %1639 = vrot.lane.b32.xlu0 %v1562, 64
        %v1640 = vpop.permute.xlu0 %1639
        %1641 = vrot.lane.b32.xlu0 %v1566, 64
        %v1642 = vpop.permute.xlu0 %1641
        %1643 = vrot.lane.b32.xlu0 %v1570, 64
        %v1644 = vpop.permute.xlu0 %1643
        %1645 = vrot.lane.b32.xlu0 %v1574, 64
        %v1646 = vpop.permute.xlu0 %1645
        %1647 = vrot.lane.b32.xlu0 %v1578, 64
        %v1648 = vpop.permute.xlu0 %1647
        %1649 = vrot.lane.b32.xlu0 %v1582, 64
        %v1650 = vpop.permute.xlu0 %1649
        %1651 = vrot.lane.b32.xlu0 %v1586, 64
        %v1652 = vpop.permute.xlu0 %1651
        %1653 = vrot.lane.b32.xlu0 %v1590, 64
        %v1654 = vpop.permute.xlu0 %1653
        %1663 = vst.msk [vmem:[%s658 + $0xa] sm:$0x1] %vm659, %v1640
        %1664 = vst.msk [vmem:[%s658 + $0x1a] sm:$0x1] %vm659, %v1642
        %1665 = vst.msk [vmem:[%s658 + $0x2a] sm:$0x1] %vm659, %v1644
        %1666 = vst.msk [vmem:[%s658 + $0x3a] sm:$0x1] %vm659, %v1646
        %1667 = vst.msk [vmem:[%s658 + $0x4a] sm:$0x1] %vm659, %v1648
        %1668 = vst.msk [vmem:[%s658 + $0x5a] sm:$0x1] %vm659, %v1650
        %1669 = vst.msk [vmem:[%s658 + $0x6a] sm:$0x1] %vm659, %v1652
        %1670 = vst.msk [vmem:[%s658 + $0x7a] sm:$0x1] %vm659, %v1654
        %1671 = vrot.lane.b32.xlu0 %v1498, 96
        %v1672 = vpop.permute.xlu0 %1671
        %1673 = vrot.lane.b32.xlu0 %v1502, 96
        %v1674 = vpop.permute.xlu0 %1673
        %1675 = vrot.lane.b32.xlu0 %v1506, 96
        %v1676 = vpop.permute.xlu0 %1675
        %1677 = vrot.lane.b32.xlu0 %v1510, 96
        %v1678 = vpop.permute.xlu0 %1677
        %1679 = vrot.lane.b32.xlu0 %v1514, 96
        %v1680 = vpop.permute.xlu0 %1679
        %1681 = vrot.lane.b32.xlu0 %v1518, 96
        %v1682 = vpop.permute.xlu0 %1681
        %1683 = vrot.lane.b32.xlu0 %v1522, 96
        %v1684 = vpop.permute.xlu0 %1683
        %1685 = vrot.lane.b32.xlu0 %v1526, 96
        %v1686 = vpop.permute.xlu0 %1685
        %1695 = vst.msk [vmem:[%s658 + $0xa] sm:$0x1] %vm774, %v1672
        %1696 = vst.msk [vmem:[%s658 + $0x1a] sm:$0x1] %vm774, %v1674
        %1697 = vst.msk [vmem:[%s658 + $0x2a] sm:$0x1] %vm774, %v1676
        %1698 = vst.msk [vmem:[%s658 + $0x3a] sm:$0x1] %vm774, %v1678
        %1699 = vst.msk [vmem:[%s658 + $0x4a] sm:$0x1] %vm774, %v1680
        %1700 = vst.msk [vmem:[%s658 + $0x5a] sm:$0x1] %vm774, %v1682
        %1701 = vst.msk [vmem:[%s658 + $0x6a] sm:$0x1] %vm774, %v1684
        %1702 = vst.msk [vmem:[%s658 + $0x7a] sm:$0x1] %vm774, %v1686
        %1703 = vrot.lane.b32.xlu0 %v1562, 32
        %v1704 = vpop.permute.xlu0 %1703
        %1705 = vrot.lane.b32.xlu0 %v1566, 32
        %v1706 = vpop.permute.xlu0 %1705
        %1707 = vrot.lane.b32.xlu0 %v1570, 32
        %v1708 = vpop.permute.xlu0 %1707
        %1709 = vrot.lane.b32.xlu0 %v1574, 32
        %v1710 = vpop.permute.xlu0 %1709
        %1711 = vrot.lane.b32.xlu0 %v1578, 32
        %v1712 = vpop.permute.xlu0 %1711
        %1713 = vrot.lane.b32.xlu0 %v1582, 32
        %v1714 = vpop.permute.xlu0 %1713
        %1715 = vrot.lane.b32.xlu0 %v1586, 32
        %v1716 = vpop.permute.xlu0 %1715
        %1717 = vrot.lane.b32.xlu0 %v1590, 32
        %v1718 = vpop.permute.xlu0 %1717
        %1727 = vst.msk [vmem:[%s658 + $0xb] sm:$0x1] %vm659, %v1704
        %1728 = vst.msk [vmem:[%s658 + $0x1b] sm:$0x1] %vm659, %v1706
        %1729 = vst.msk [vmem:[%s658 + $0x2b] sm:$0x1] %vm659, %v1708
        %1730 = vst.msk [vmem:[%s658 + $0x3b] sm:$0x1] %vm659, %v1710
        %1731 = vst.msk [vmem:[%s658 + $0x4b] sm:$0x1] %vm659, %v1712
        %1732 = vst.msk [vmem:[%s658 + $0x5b] sm:$0x1] %vm659, %v1714
        %1733 = vst.msk [vmem:[%s658 + $0x6b] sm:$0x1] %vm659, %v1716
        %1734 = vst.msk [vmem:[%s658 + $0x7b] sm:$0x1] %vm659, %v1718
        %1735 = vrot.lane.b32.xlu0 %v1498, 64
        %v1736 = vpop.permute.xlu0 %1735
        %1737 = vrot.lane.b32.xlu0 %v1502, 64
        %v1738 = vpop.permute.xlu0 %1737
        %1739 = vrot.lane.b32.xlu0 %v1506, 64
        %v1740 = vpop.permute.xlu0 %1739
        %1741 = vrot.lane.b32.xlu0 %v1510, 64
        %v1742 = vpop.permute.xlu0 %1741
        %1743 = vrot.lane.b32.xlu0 %v1514, 64
        %v1744 = vpop.permute.xlu0 %1743
        %1745 = vrot.lane.b32.xlu0 %v1518, 64
        %v1746 = vpop.permute.xlu0 %1745
        %1747 = vrot.lane.b32.xlu0 %v1522, 64
        %v1748 = vpop.permute.xlu0 %1747
        %1749 = vrot.lane.b32.xlu0 %v1526, 64
        %v1750 = vpop.permute.xlu0 %1749
        %1759 = vst.msk [vmem:[%s658 + $0xb] sm:$0x1] %vm774, %v1736
        %1760 = vst.msk [vmem:[%s658 + $0x1b] sm:$0x1] %vm774, %v1738
        %1761 = vst.msk [vmem:[%s658 + $0x2b] sm:$0x1] %vm774, %v1740
        %1762 = vst.msk [vmem:[%s658 + $0x3b] sm:$0x1] %vm774, %v1742
        %1763 = vst.msk [vmem:[%s658 + $0x4b] sm:$0x1] %vm774, %v1744
        %1764 = vst.msk [vmem:[%s658 + $0x5b] sm:$0x1] %vm774, %v1746
        %1765 = vst.msk [vmem:[%s658 + $0x6b] sm:$0x1] %vm774, %v1748
        %1766 = vst.msk [vmem:[%s658 + $0x7b] sm:$0x1] %vm774, %v1750
        %v1768 = vcombine.high %v595, %v595
        %v1770 = vunpack.c.l.s4 1966171168
        %v1771 = vunpack.c.0.s8 %v1770
        %v1772 = vlaneseq
        %v1773 = vshrl.u32 %v1772, 7
        %v1774 = vsub.s32 %v1771, %v1773
        %v1775 = vrot.slane %v595, %v1774
        %v1777 = vunpack.c.l.s4 1966171168
        %v1778 = vunpack.c.0.s8 %v1777
        %v1779 = vlaneseq
        %v1780 = vshrl.u32 %v1779, 7
        %v1781 = vsub.s32 %v1778, %v1780
        %v1782 = vrot.slane %v1768, %v1781
        %v1783 = vcombine.high %v1775, %v1775
        %v1784 = vcombine.high %v1782, %v1782
        %v1786 = vunpack.c.l.s4 1966171168
        %v1787 = vunpack.c.0.s8 %v1786
        %v1788 = vlaneseq
        %v1789 = vshrl.u32 %v1788, 7
        %v1790 = vsub.s32 %v1787, %v1789
        %v1791 = vrot.slane %v1775, %v1790
        %v1793 = vunpack.c.l.s4 1966171168
        %v1794 = vunpack.c.0.s8 %v1793
        %v1795 = vlaneseq
        %v1796 = vshrl.u32 %v1795, 7
        %v1797 = vsub.s32 %v1794, %v1796
        %v1798 = vrot.slane %v1782, %v1797
        %v1800 = vunpack.c.l.s4 1966171168
        %v1801 = vunpack.c.0.s8 %v1800
        %v1802 = vlaneseq
        %v1803 = vshrl.u32 %v1802, 7
        %v1804 = vsub.s32 %v1801, %v1803
        %v1805 = vrot.slane %v1783, %v1804
        %v1807 = vunpack.c.l.s4 1966171168
        %v1808 = vunpack.c.0.s8 %v1807
        %v1809 = vlaneseq
        %v1810 = vshrl.u32 %v1809, 7
        %v1811 = vsub.s32 %v1808, %v1810
        %v1812 = vrot.slane %v1784, %v1811
        %v1813 = vcombine.high %v1791, %v1791
        %v1814 = vcombine.high %v1798, %v1798
        %v1815 = vcombine.high %v1805, %v1805
        %v1816 = vcombine.high %v1812, %v1812
        %1825 = vst.msk [vmem:[%s658 + $0xc] sm:$0x1] %vm659, %v1791
        %1826 = vst.msk [vmem:[%s658 + $0x1c] sm:$0x1] %vm659, %v1805
        %1827 = vst.msk [vmem:[%s658 + $0x2c] sm:$0x1] %vm659, %v1813
        %1828 = vst.msk [vmem:[%s658 + $0x3c] sm:$0x1] %vm659, %v1815
        %1829 = vst.msk [vmem:[%s658 + $0x4c] sm:$0x1] %vm659, %v1798
        %1830 = vst.msk [vmem:[%s658 + $0x5c] sm:$0x1] %vm659, %v1812
        %1831 = vst.msk [vmem:[%s658 + $0x6c] sm:$0x1] %vm659, %v1814
        %1832 = vst.msk [vmem:[%s658 + $0x7c] sm:$0x1] %vm659, %v1816
        %v1834 = vcombine.high %v599, %v599
        %v1836 = vunpack.c.l.s4 1966171168
        %v1837 = vunpack.c.0.s8 %v1836
        %v1838 = vlaneseq
        %v1839 = vshrl.u32 %v1838, 7
        %v1840 = vsub.s32 %v1837, %v1839
        %v1841 = vrot.slane %v599, %v1840
        %v1843 = vunpack.c.l.s4 1966171168
        %v1844 = vunpack.c.0.s8 %v1843
        %v1845 = vlaneseq
        %v1846 = vshrl.u32 %v1845, 7
        %v1847 = vsub.s32 %v1844, %v1846
        %v1848 = vrot.slane %v1834, %v1847
        %v1849 = vcombine.high %v1841, %v1841
        %v1850 = vcombine.high %v1848, %v1848
        %v1852 = vunpack.c.l.s4 1966171168
        %v1853 = vunpack.c.0.s8 %v1852
        %v1854 = vlaneseq
        %v1855 = vshrl.u32 %v1854, 7
        %v1856 = vsub.s32 %v1853, %v1855
        %v1857 = vrot.slane %v1841, %v1856
        %v1859 = vunpack.c.l.s4 1966171168
        %v1860 = vunpack.c.0.s8 %v1859
        %v1861 = vlaneseq
        %v1862 = vshrl.u32 %v1861, 7
        %v1863 = vsub.s32 %v1860, %v1862
        %v1864 = vrot.slane %v1848, %v1863
        %v1866 = vunpack.c.l.s4 1966171168
        %v1867 = vunpack.c.0.s8 %v1866
        %v1868 = vlaneseq
        %v1869 = vshrl.u32 %v1868, 7
        %v1870 = vsub.s32 %v1867, %v1869
        %v1871 = vrot.slane %v1849, %v1870
        %v1873 = vunpack.c.l.s4 1966171168
        %v1874 = vunpack.c.0.s8 %v1873
        %v1875 = vlaneseq
        %v1876 = vshrl.u32 %v1875, 7
        %v1877 = vsub.s32 %v1874, %v1876
        %v1878 = vrot.slane %v1850, %v1877
        %v1879 = vcombine.high %v1857, %v1857
        %v1880 = vcombine.high %v1864, %v1864
        %v1881 = vcombine.high %v1871, %v1871
        %v1882 = vcombine.high %v1878, %v1878
        %v1883 = vlaneseq
        %v1884 = vshrl.u32 %v1883, 7
        %v1885 = vsub.s32 0, %v1884
        %v1886 = vrot.slane %v1857, %v1885
        %v1887 = vlaneseq
        %v1888 = vshrl.u32 %v1887, 7
        %v1889 = vsub.s32 0, %v1888
        %v1890 = vrot.slane %v1871, %v1889
        %v1891 = vlaneseq
        %v1892 = vshrl.u32 %v1891, 7
        %v1893 = vsub.s32 0, %v1892
        %v1894 = vrot.slane %v1879, %v1893
        %v1895 = vlaneseq
        %v1896 = vshrl.u32 %v1895, 7
        %v1897 = vsub.s32 0, %v1896
        %v1898 = vrot.slane %v1881, %v1897
        %v1899 = vlaneseq
        %v1900 = vshrl.u32 %v1899, 7
        %v1901 = vsub.s32 0, %v1900
        %v1902 = vrot.slane %v1864, %v1901
        %v1903 = vlaneseq
        %v1904 = vshrl.u32 %v1903, 7
        %v1905 = vsub.s32 0, %v1904
        %v1906 = vrot.slane %v1878, %v1905
        %v1907 = vlaneseq
        %v1908 = vshrl.u32 %v1907, 7
        %v1909 = vsub.s32 0, %v1908
        %v1910 = vrot.slane %v1880, %v1909
        %v1911 = vlaneseq
        %v1912 = vshrl.u32 %v1911, 7
        %v1913 = vsub.s32 0, %v1912
        %v1914 = vrot.slane %v1882, %v1913
        %1915 = vrot.lane.b32.xlu0 %v1886, 32
        %v1916 = vpop.permute.xlu0 %1915
        %1917 = vrot.lane.b32.xlu0 %v1890, 32
        %v1918 = vpop.permute.xlu0 %1917
        %1919 = vrot.lane.b32.xlu0 %v1894, 32
        %v1920 = vpop.permute.xlu0 %1919
        %1921 = vrot.lane.b32.xlu0 %v1898, 32
        %v1922 = vpop.permute.xlu0 %1921
        %1923 = vrot.lane.b32.xlu0 %v1902, 32
        %v1924 = vpop.permute.xlu0 %1923
        %1925 = vrot.lane.b32.xlu0 %v1906, 32
        %v1926 = vpop.permute.xlu0 %1925
        %1927 = vrot.lane.b32.xlu0 %v1910, 32
        %v1928 = vpop.permute.xlu0 %1927
        %1929 = vrot.lane.b32.xlu0 %v1914, 32
        %v1930 = vpop.permute.xlu0 %1929
        %1939 = vst.msk [vmem:[%s658 + $0xc] sm:$0x1] %vm774, %v1916
        %1940 = vst.msk [vmem:[%s658 + $0x1c] sm:$0x1] %vm774, %v1918
        %1941 = vst.msk [vmem:[%s658 + $0x2c] sm:$0x1] %vm774, %v1920
        %1942 = vst.msk [vmem:[%s658 + $0x3c] sm:$0x1] %vm774, %v1922
        %1943 = vst.msk [vmem:[%s658 + $0x4c] sm:$0x1] %vm774, %v1924
        %1944 = vst.msk [vmem:[%s658 + $0x5c] sm:$0x1] %vm774, %v1926
        %1945 = vst.msk [vmem:[%s658 + $0x6c] sm:$0x1] %vm774, %v1928
        %1946 = vst.msk [vmem:[%s658 + $0x7c] sm:$0x1] %vm774, %v1930
        %v1947 = vlaneseq
        %v1948 = vshrl.u32 %v1947, 7
        %v1949 = vsub.s32 0, %v1948
        %v1950 = vrot.slane %v1791, %v1949
        %v1951 = vlaneseq
        %v1952 = vshrl.u32 %v1951, 7
        %v1953 = vsub.s32 0, %v1952
        %v1954 = vrot.slane %v1805, %v1953
        %v1955 = vlaneseq
        %v1956 = vshrl.u32 %v1955, 7
        %v1957 = vsub.s32 0, %v1956
        %v1958 = vrot.slane %v1813, %v1957
        %v1959 = vlaneseq
        %v1960 = vshrl.u32 %v1959, 7
        %v1961 = vsub.s32 0, %v1960
        %v1962 = vrot.slane %v1815, %v1961
        %v1963 = vlaneseq
        %v1964 = vshrl.u32 %v1963, 7
        %v1965 = vsub.s32 0, %v1964
        %v1966 = vrot.slane %v1798, %v1965
        %v1967 = vlaneseq
        %v1968 = vshrl.u32 %v1967, 7
        %v1969 = vsub.s32 0, %v1968
        %v1970 = vrot.slane %v1812, %v1969
        %v1971 = vlaneseq
        %v1972 = vshrl.u32 %v1971, 7
        %v1973 = vsub.s32 0, %v1972
        %v1974 = vrot.slane %v1814, %v1973
        %v1975 = vlaneseq
        %v1976 = vshrl.u32 %v1975, 7
        %v1977 = vsub.s32 0, %v1976
        %v1978 = vrot.slane %v1816, %v1977
        %1979 = vrot.lane.b32.xlu0 %v1950, 96
        %v1980 = vpop.permute.xlu0 %1979
        %1981 = vrot.lane.b32.xlu0 %v1954, 96
        %v1982 = vpop.permute.xlu0 %1981
        %1983 = vrot.lane.b32.xlu0 %v1958, 96
        %v1984 = vpop.permute.xlu0 %1983
        %1985 = vrot.lane.b32.xlu0 %v1962, 96
        %v1986 = vpop.permute.xlu0 %1985
        %1987 = vrot.lane.b32.xlu0 %v1966, 96
        %v1988 = vpop.permute.xlu0 %1987
        %1989 = vrot.lane.b32.xlu0 %v1970, 96
        %v1990 = vpop.permute.xlu0 %1989
        %1991 = vrot.lane.b32.xlu0 %v1974, 96
        %v1992 = vpop.permute.xlu0 %1991
        %1993 = vrot.lane.b32.xlu0 %v1978, 96
        %v1994 = vpop.permute.xlu0 %1993
        %2003 = vst.msk [vmem:[%s658 + $0xd] sm:$0x1] %vm659, %v1980
        %2004 = vst.msk [vmem:[%s658 + $0x1d] sm:$0x1] %vm659, %v1982
        %2005 = vst.msk [vmem:[%s658 + $0x2d] sm:$0x1] %vm659, %v1984
        %2006 = vst.msk [vmem:[%s658 + $0x3d] sm:$0x1] %vm659, %v1986
        %2007 = vst.msk [vmem:[%s658 + $0x4d] sm:$0x1] %vm659, %v1988
        %2008 = vst.msk [vmem:[%s658 + $0x5d] sm:$0x1] %vm659, %v1990
        %2009 = vst.msk [vmem:[%s658 + $0x6d] sm:$0x1] %vm659, %v1992
        %2010 = vst.msk [vmem:[%s658 + $0x7d] sm:$0x1] %vm659, %v1994
        %2019 = vst.msk [vmem:[%s658 + $0xd] sm:$0x1] %vm774, %v1857
        %2020 = vst.msk [vmem:[%s658 + $0x1d] sm:$0x1] %vm774, %v1871
        %2021 = vst.msk [vmem:[%s658 + $0x2d] sm:$0x1] %vm774, %v1879
        %2022 = vst.msk [vmem:[%s658 + $0x3d] sm:$0x1] %vm774, %v1881
        %2023 = vst.msk [vmem:[%s658 + $0x4d] sm:$0x1] %vm774, %v1864
        %2024 = vst.msk [vmem:[%s658 + $0x5d] sm:$0x1] %vm774, %v1878
        %2025 = vst.msk [vmem:[%s658 + $0x6d] sm:$0x1] %vm774, %v1880
        %2026 = vst.msk [vmem:[%s658 + $0x7d] sm:$0x1] %vm774, %v1882
        %2027 = vrot.lane.b32.xlu0 %v1950, 64
        %v2028 = vpop.permute.xlu0 %2027
        %2029 = vrot.lane.b32.xlu0 %v1954, 64
        %v2030 = vpop.permute.xlu0 %2029
        %2031 = vrot.lane.b32.xlu0 %v1958, 64
        %v2032 = vpop.permute.xlu0 %2031
        %2033 = vrot.lane.b32.xlu0 %v1962, 64
        %v2034 = vpop.permute.xlu0 %2033
        %2035 = vrot.lane.b32.xlu0 %v1966, 64
        %v2036 = vpop.permute.xlu0 %2035
        %2037 = vrot.lane.b32.xlu0 %v1970, 64
        %v2038 = vpop.permute.xlu0 %2037
        %2039 = vrot.lane.b32.xlu0 %v1974, 64
        %v2040 = vpop.permute.xlu0 %2039
        %2041 = vrot.lane.b32.xlu0 %v1978, 64
        %v2042 = vpop.permute.xlu0 %2041
        %2051 = vst.msk [vmem:[%s658 + $0xe] sm:$0x1] %vm659, %v2028
        %2052 = vst.msk [vmem:[%s658 + $0x1e] sm:$0x1] %vm659, %v2030
        %2053 = vst.msk [vmem:[%s658 + $0x2e] sm:$0x1] %vm659, %v2032
        %2054 = vst.msk [vmem:[%s658 + $0x3e] sm:$0x1] %vm659, %v2034
        %2055 = vst.msk [vmem:[%s658 + $0x4e] sm:$0x1] %vm659, %v2036
        %2056 = vst.msk [vmem:[%s658 + $0x5e] sm:$0x1] %vm659, %v2038
        %2057 = vst.msk [vmem:[%s658 + $0x6e] sm:$0x1] %vm659, %v2040
        %2058 = vst.msk [vmem:[%s658 + $0x7e] sm:$0x1] %vm659, %v2042
        %2059 = vrot.lane.b32.xlu0 %v1886, 96
        %v2060 = vpop.permute.xlu0 %2059
        %2061 = vrot.lane.b32.xlu0 %v1890, 96
        %v2062 = vpop.permute.xlu0 %2061
        %2063 = vrot.lane.b32.xlu0 %v1894, 96
        %v2064 = vpop.permute.xlu0 %2063
        %2065 = vrot.lane.b32.xlu0 %v1898, 96
        %v2066 = vpop.permute.xlu0 %2065
        %2067 = vrot.lane.b32.xlu0 %v1902, 96
        %v2068 = vpop.permute.xlu0 %2067
        %2069 = vrot.lane.b32.xlu0 %v1906, 96
        %v2070 = vpop.permute.xlu0 %2069
        %2071 = vrot.lane.b32.xlu0 %v1910, 96
        %v2072 = vpop.permute.xlu0 %2071
        %2073 = vrot.lane.b32.xlu0 %v1914, 96
        %v2074 = vpop.permute.xlu0 %2073
        %2083 = vst.msk [vmem:[%s658 + $0xe] sm:$0x1] %vm774, %v2060
        %2084 = vst.msk [vmem:[%s658 + $0x1e] sm:$0x1] %vm774, %v2062
        %2085 = vst.msk [vmem:[%s658 + $0x2e] sm:$0x1] %vm774, %v2064
        %2086 = vst.msk [vmem:[%s658 + $0x3e] sm:$0x1] %vm774, %v2066
        %2087 = vst.msk [vmem:[%s658 + $0x4e] sm:$0x1] %vm774, %v2068
        %2088 = vst.msk [vmem:[%s658 + $0x5e] sm:$0x1] %vm774, %v2070
        %2089 = vst.msk [vmem:[%s658 + $0x6e] sm:$0x1] %vm774, %v2072
        %2090 = vst.msk [vmem:[%s658 + $0x7e] sm:$0x1] %vm774, %v2074
        %2091 = vrot.lane.b32.xlu0 %v1950, 32
        %v2092 = vpop.permute.xlu0 %2091
        %2093 = vrot.lane.b32.xlu0 %v1954, 32
        %v2094 = vpop.permute.xlu0 %2093
        %2095 = vrot.lane.b32.xlu0 %v1958, 32
        %v2096 = vpop.permute.xlu0 %2095
        %2097 = vrot.lane.b32.xlu0 %v1962, 32
        %v2098 = vpop.permute.xlu0 %2097
        %2099 = vrot.lane.b32.xlu0 %v1966, 32
        %v2100 = vpop.permute.xlu0 %2099
        %2101 = vrot.lane.b32.xlu0 %v1970, 32
        %v2102 = vpop.permute.xlu0 %2101
        %2103 = vrot.lane.b32.xlu0 %v1974, 32
        %v2104 = vpop.permute.xlu0 %2103
        %2105 = vrot.lane.b32.xlu0 %v1978, 32
        %v2106 = vpop.permute.xlu0 %2105
        %2115 = vst.msk [vmem:[%s658 + $0xf] sm:$0x1] %vm659, %v2092
        %2116 = vst.msk [vmem:[%s658 + $0x1f] sm:$0x1] %vm659, %v2094
        %2117 = vst.msk [vmem:[%s658 + $0x2f] sm:$0x1] %vm659, %v2096
        %2118 = vst.msk [vmem:[%s658 + $0x3f] sm:$0x1] %vm659, %v2098
        %2119 = vst.msk [vmem:[%s658 + $0x4f] sm:$0x1] %vm659, %v2100
        %2120 = vst.msk [vmem:[%s658 + $0x5f] sm:$0x1] %vm659, %v2102
        %2121 = vst.msk [vmem:[%s658 + $0x6f] sm:$0x1] %vm659, %v2104
        %2122 = vst.msk [vmem:[%s658 + $0x7f] sm:$0x1] %vm659, %v2106
        %2123 = vrot.lane.b32.xlu0 %v1886, 64
        %v2124 = vpop.permute.xlu0 %2123
        %2125 = vrot.lane.b32.xlu0 %v1890, 64
        %v2126 = vpop.permute.xlu0 %2125
        %2127 = vrot.lane.b32.xlu0 %v1894, 64
        %v2128 = vpop.permute.xlu0 %2127
        %2129 = vrot.lane.b32.xlu0 %v1898, 64
        %v2130 = vpop.permute.xlu0 %2129
        %2131 = vrot.lane.b32.xlu0 %v1902, 64
        %v2132 = vpop.permute.xlu0 %2131
        %2133 = vrot.lane.b32.xlu0 %v1906, 64
        %v2134 = vpop.permute.xlu0 %2133
        %2135 = vrot.lane.b32.xlu0 %v1910, 64
        %v2136 = vpop.permute.xlu0 %2135
        %2137 = vrot.lane.b32.xlu0 %v1914, 64
        %v2138 = vpop.permute.xlu0 %2137
        %2147 = vst.msk [vmem:[%s658 + $0xf] sm:$0x1] %vm774, %v2124
        %2148 = vst.msk [vmem:[%s658 + $0x1f] sm:$0x1] %vm774, %v2126
        %2149 = vst.msk [vmem:[%s658 + $0x2f] sm:$0x1] %vm774, %v2128
        %2150 = vst.msk [vmem:[%s658 + $0x3f] sm:$0x1] %vm774, %v2130
        %2151 = vst.msk [vmem:[%s658 + $0x4f] sm:$0x1] %vm774, %v2132
        %2152 = vst.msk [vmem:[%s658 + $0x5f] sm:$0x1] %vm774, %v2134
        %2153 = vst.msk [vmem:[%s658 + $0x6f] sm:$0x1] %vm774, %v2136
        %2154 = vst.msk [vmem:[%s658 + $0x7f] sm:$0x1] %vm774, %v2138
        %s2155 = sand.u32 %s141, 1
        %s2156 = scalar_lea.sflag [#allocation4], %s2155
        %s2157 = sand.u32 %s141, 1
        %s2158 = smul.addr %s2157, 256
        %s2159 = scalar_lea.vmem [#allocation5], %s2158
        // Predicated region
        $region41: #{tpu_custom_call.1} parent=35 // pred_check
          %p2160 = pneg %p151
        $region42: #{tpu_custom_call.1} parent=35 // pred_check_branch
          %2162 = sbr.rel (%p2160) target = $region44
        $region43: #{tpu_custom_call.1} parent=35 // pred_region
          %s2163 = smul.u32 2, %s26
          %s2165 = ssub.s32 4096, 4096
          %2166 = vsyncadd %s2156, %s2165
          %s2167 = smul.addr %s25, 32
          %s2168 = sadd.s32 %s2163, %s2167
          %s2169 = smul.addr %s2168, 128
          %s2170 = scalar_lea.hbm %s4, %s2169
          %s2171 = sshll.u32 %s2159, 4
          %s2172 = int_to_ptr.vmem [resolvable:$true] %s2171
          %2177 = dma.vmem_to_hbm [thread:$0]  %s2172, 4096, %s2170, %s2156, 128, 128, 8
        $region44: #{tpu_custom_call.1} parent=35 // pred_fallthru
          _
      $region36: #{tpu_custom_call.1} parent=5 // pred_fallthru
        _
      %p2178 = scmp.le.s32.totalorder 2, %s16
      // Predicated region
      $region45: #{tpu_custom_call.1} parent=5 // pred_check
        %p2179 = pneg %p2178
      $region46: #{tpu_custom_call.1} parent=5 // pred_check_branch
        %2181 = sbr.rel (%p2179) target = $region48
      $region47: #{tpu_custom_call.1} parent=5 // pred_region
        %s2182 = ssub.s32 %s16, 2
        // Predicated region
        $region49: #{tpu_custom_call.1} parent=47 // pred_check
          %p2183 = pneg %p157
        $region50: #{tpu_custom_call.1} parent=47 // pred_check_branch
          %2185 = sbr.rel (%p2183) target = $region52
        $region51: #{tpu_custom_call.1} parent=47 // pred_region
          %s2186 = sand.u32 %s142, 1
          %s2187 = scalar_lea.sflag [#allocation4], %s2186
          %s2188 = sand.u32 %s142, 1
          %s2189 = smul.addr %s2188, 256
          %s2190 = scalar_lea.vmem [#allocation5], %s2189
          %2191 = dma.done %s2187, 4096
        $region52: #{tpu_custom_call.1} parent=47 // pred_fallthru
          _
      $region48: #{tpu_custom_call.1} parent=5 // pred_fallthru
        _
    $region6: #{tpu_custom_call.1} parent=1 // loop_footer
      %s20 = sadd.s32 1, %s16
    $region7: #{tpu_custom_call.1} parent=1 // loop_footer_branch
      %15 = sbr.rel target = $region3
    $region8: #{tpu_custom_call.1} parent=1 // loop_exit
      _
    %2192 = vsyncpa [#allocation3], 1
    %s2193 = scalar_lea.sflag [#allocation3], 1
    %2194 = vsyncpa %s2193, 1
    %2195 = vsyncpa [#allocation4], 1
    %s2196 = scalar_lea.sflag [#allocation4], 1
    %2197 = vsyncpa %s2196, 1

</llo_original>
